<compile_context>
chip_gen: v7x
topology: tpu7x:2x2x1
jax: 0.10.0
libtpu: 0.0.40
codegen_flags: <defaults>
</compile_context>

<pallas_src>
import functools

import jax
import jax.numpy as jnp
from jax import lax
from jax.experimental import pallas as pl
from jax.experimental.pallas import tpu as pltpu

_LANE = 128


def _round_up(n, m):
    return ((n + m - 1) // m) * m


# ----------------------------------------------------------------------------------
# Fused Pallas kernel: both LSTM layers, batch=1, pipelined scan over T, one MXU
# push per serial step.
# ----------------------------------------------------------------------------------
def _encoder_kernel(x_ref, wih1_ref, b1_ref, wblk_ref, b2_ref, hn_ref,
                    *, T, H1p, H2, G1, G2):
    # x_ref   : (T, F)            input sequence
    # wih1_ref: (F, G1)           layer-1 input->gates, [i,f,o,g], each gate padded to H1p
    # b1_ref  : (1, G1)           layer-1 b_ih + b_hh (same packing)
    # wblk_ref: (H1p + H2, G1+G2) block weight [[whh1, wih2], [0, whh2]]
    #                             layer-2 gates packed contiguously ([i|f|o|g], H2 each)
    # b2_ref  : (1, G2)           layer-2 b_ih + b_hh (contiguous packing)
    # hn_ref  : (1, H2p)          final layer-2 hidden state (lane-dense, padded)

    # ---- Hoisted layer-1 input projection: no sequential dependency, one matmul. ----
    xg1 = (jnp.dot(x_ref[...], wih1_ref[...], preferred_element_type=jnp.float32)
           + b1_ref[...])                                   # (T, G1), 4 vregs at T=8

    b2 = b2_ref[...]                                        # (1, G2)

    def cell1(gates, c):
        # Layer-1 gate layout [i, f, o, g], each H1p (128-lane aligned) wide.
        sig = jax.nn.sigmoid(gates[:, :3 * H1p])
        i = sig[:, 0 * H1p:1 * H1p]
        f = sig[:, 1 * H1p:2 * H1p]
        o = sig[:, 2 * H1p:3 * H1p]
        g = jnp.tanh(gates[:, 3 * H1p:])
        c_new = f * c + i * g
        return o * jnp.tanh(c_new), c_new

    def cell2(gates, c):
        # Layer-2 gate layout [i, f, o, g] packed contiguously, H2 lanes each.
        sig = jax.nn.sigmoid(gates[:, :3 * H2])
        i = sig[:, 0 * H2:1 * H2]
        f = sig[:, 1 * H2:2 * H2]
        o = sig[:, 2 * H2:3 * H2]
        g = jnp.tanh(gates[:, 3 * H2:4 * H2])
        c_new = f * c + i * g
        return o * jnp.tanh(c_new), c_new

    # Layer-1 step 0: h0 = c0 = 0, so the recurrent matvec vanishes.
    h1, c1 = cell1(xg1[0:1, :], jnp.zeros((1, H1p), jnp.float32))
    h2 = jnp.zeros((1, H2), jnp.float32)
    c2 = jnp.zeros((1, H2), jnp.float32)

    # Pipelined recurrence. Layer-1 step t+1 and layer-2 step t both depend only on
    # (h1_t, h2_{t-1}), so they merge into ONE matmul per step:
    #   [h1_t | h2_{t-1}] @ [[whh1, wih2], [0, whh2]]
    # The weight ref is read inside the step so Mosaic streams RHS tiles from VMEM.
    for t in range(T - 1):
        hcat = jnp.concatenate([h1, h2], axis=-1)                       # (1, H1p+H2)
        gall = jnp.dot(hcat, wblk_ref[...], preferred_element_type=jnp.float32)
        g1 = xg1[t + 1:t + 2, :] + gall[:, :G1]
        g2 = gall[:, G1:] + b2
        h1, c1 = cell1(g1, c1)
        h2, c2 = cell2(g2, c2)

    # Epilogue: final layer-2 step consumes the last layer-1 hidden state.
    hcat = jnp.concatenate([h1, h2], axis=-1)
    gall = jnp.dot(hcat, wblk_ref[...], preferred_element_type=jnp.float32)
    h2, _ = cell2(gall[:, G1:] + b2, c2)

    # Lane-dense (padded) output write; sliced back to embedding_dim outside.
    pad = hn_ref.shape[1] - H2
    if pad:
        hn_ref[...] = jnp.concatenate(
            [h2, jnp.zeros((1, pad), jnp.float32)], axis=-1)
    else:
        hn_ref[...] = h2


def encoder_pallas(x, packed):
    """x: (T, F) f32; packed: pre-packed lane-padded weights. Returns (1, H2p)."""
    T, F = x.shape
    G1 = packed["wih1"].shape[1]
    H1p = G1 // 4
    Kblk, Wblk = packed["w_block"].shape
    H2 = Kblk - H1p
    G2 = Wblk - G1
    H2p = _round_up(H2, _LANE)

    flops = 2 * T * F * G1 + 2 * T * Kblk * (G1 + G2)
    transcendentals = T * (G1 + G2 + H1p + H2)
    bytes_accessed = 4 * (T * F + F * G1 + G1 + Kblk * (G1 + G2) + G2 + H2p)

    vmem = pl.BlockSpec(memory_space=pltpu.MemorySpace.VMEM)
    kernel = functools.partial(_encoder_kernel, T=T, H1p=H1p, H2=H2, G1=G1, G2=G2)
    return pl.pallas_call(
        kernel,
        out_shape=jax.ShapeDtypeStruct((1, H2p), jnp.float32),
        in_specs=[vmem] * 5,
        out_specs=vmem,
        cost_estimate=pl.CostEstimate(flops=flops,
                                      transcendentals=transcendentals,
                                      bytes_accessed=bytes_accessed),
    )(x, packed["wih1"], packed["b1"], packed["w_block"], packed["b2"])


# ----------------------------------------------------------------------------------
# Parameter init (PyTorch layout) and one-time packing into the kernel layout.
# ----------------------------------------------------------------------------------
def init_encoder_params(key, seq_len, n_features, embedding_dim):
    hidden_dim = 2 * embedding_dim
    keys = jax.random.split(key, 8)

    def unif(k, shape, fan):
        bound = 1.0 / jnp.sqrt(jnp.float32(fan))
        return jax.random.uniform(k, shape, jnp.float32, -bound, bound)

    return {
        # rnn1: n_features -> hidden_dim     (PyTorch gate order [i, f, g, o])
        "w_ih1": unif(keys[0], (4 * hidden_dim, n_features), hidden_dim),
        "w_hh1": unif(keys[1], (4 * hidden_dim, hidden_dim), hidden_dim),
        "b_ih1": unif(keys[2], (4 * hidden_dim,), hidden_dim),
        "b_hh1": unif(keys[3], (4 * hidden_dim,), hidden_dim),
        # rnn2: hidden_dim -> embedding_dim
        "w_ih2": unif(keys[4], (4 * embedding_dim, hidden_dim), embedding_dim),
        "w_hh2": unif(keys[5], (4 * embedding_dim, embedding_dim), embedding_dim),
        "b_ih2": unif(keys[6], (4 * embedding_dim,), embedding_dim),
        "b_hh2": unif(keys[7], (4 * embedding_dim,), embedding_dim),
    }


def _pack_cols(w, H, Hg):
    # w: PyTorch (4H, IN), gate order [i, f, g, o].
    # Returns (IN, 4*Hg), gate order [i, f, o, g], each gate zero-padded H -> Hg.
    gates = [w[0 * H:1 * H], w[1 * H:2 * H], w[3 * H:4 * H], w[2 * H:3 * H]]  # i,f,o,g
    cols = [jnp.pad(g.T, ((0, 0), (0, Hg - H))) for g in gates]
    return jnp.concatenate(cols, axis=1)


def _pack_bias(b_ih, b_hh, H, Hg):
    b = b_ih + b_hh
    gates = [b[0 * H:1 * H], b[1 * H:2 * H], b[3 * H:4 * H], b[2 * H:3 * H]]  # i,f,o,g
    return jnp.concatenate([jnp.pad(g, (0, Hg - H)) for g in gates])[None, :]


def prepare_encoder_params(params, n_features, embedding_dim):
    """Pack PyTorch-layout params once, outside the hot path."""
    H1 = 2 * embedding_dim
    H2 = embedding_dim
    H1p = _round_up(H1, _LANE)          # layer-1 per-gate padded width
    G1 = 4 * H1p                        # layer-1 packed gate row width
    G2 = _round_up(4 * H2, _LANE)       # layer-2 gates packed contiguously

    # Layer-1 input projection (hoisted in the kernel).
    wih1 = _pack_cols(params["w_ih1"], H1, H1p)                               # (F, G1)
    b1 = _pack_bias(params["b_ih1"], params["b_hh1"], H1, H1p)                # (1, G1)

    # Block recurrent weight [[whh1, wih2], [0, whh2]] : (H1p + H2, G1 + G2)
    whh1 = jnp.pad(_pack_cols(params["w_hh1"], H1, H1p),
                   ((0, H1p - H1), (0, 0)))                                   # (H1p, G1)
    wih2 = jnp.pad(_pack_cols(params["w_ih2"], H2, H2),
                   ((0, H1p - H1), (0, G2 - 4 * H2)))                         # (H1p, G2)
    whh2 = jnp.pad(_pack_cols(params["w_hh2"], H2, H2),
                   ((0, 0), (0, G2 - 4 * H2)))                                # (H2, G2)
    top = jnp.concatenate([whh1, wih2], axis=1)
    bot = jnp.concatenate([jnp.zeros((H2, G1), jnp.float32), whh2], axis=1)
    w_block = jnp.concatenate([top, bot], axis=0)                             # (H1p+H2, G1+G2)

    b2 = jnp.pad(_pack_bias(params["b_ih2"], params["b_hh2"], H2, H2),
                 ((0, 0), (0, G2 - 4 * H2)))                                  # (1, G2)

    packed = {"wih1": wih1, "b1": b1, "w_block": w_block, "b2": b2}
    return jax.tree_util.tree_map(lambda a: a.astype(jnp.float32), packed)


@functools.partial(jax.jit, static_argnums=(2, 3, 4))
def encoder_forward(x, packed, seq_len, n_features, embedding_dim):
    # PyTorch reshapes to (1, seq_len, n_features); batch=1, so work in 2-D.
    x = x.reshape((seq_len, n_features)).astype(jnp.float32)
    hn_padded = encoder_pallas(x, packed)          # (1, H2p), lane-dense
    return hn_padded[:, :embedding_dim]            # (1, embedding_dim)


# ----------------------------------------------------------------------------------
# Pure-JAX reference (PyTorch-layout params) for the correctness check.
# ----------------------------------------------------------------------------------
def _lstm_ref(x, w_ih, w_hh, b_ih, b_hh):
    H = w_hh.shape[1]

    def step(carry, x_t):
        h, c = carry
        g = x_t @ w_ih.T + h @ w_hh.T + b_ih + b_hh
        i = jax.nn.sigmoid(g[0 * H:1 * H])
        f = jax.nn.sigmoid(g[1 * H:2 * H])
        gg = jnp.tanh(g[2 * H:3 * H])
        o = jax.nn.sigmoid(g[3 * H:4 * H])
        c = f * c + i * gg
        h = o * jnp.tanh(c)
        return (h, c), h

    (h_n, _), ys = lax.scan(step, (jnp.zeros(H), jnp.zeros(H)), x)
    return ys, h_n


def encoder_ref(x, params, seq_len, n_features, embedding_dim):
    x = x.reshape((seq_len, n_features)).astype(jnp.float32)
    ys1, _ = _lstm_ref(x, params["w_ih1"], params["w_hh1"], params["b_ih1"], params["b_hh1"])
    _, h_n = _lstm_ref(ys1, params["w_ih2"], params["w_hh2"], params["b_ih2"], params["b_hh2"])
    return h_n.reshape((1, embedding_dim))


if __name__ == "__main__":
    seq_len = 8
    n_features = 4
    embedding_dim = 32   # hidden_dim = 64

    key = jax.random.PRNGKey(0)
    k_param, k_x = jax.random.split(key)
    params = init_encoder_params(k_param, seq_len, n_features, embedding_dim)
    x = jax.random.normal(k_x, (seq_len, n_features), jnp.float32)

    # One-time packing (outside the jitted hot path).
    packed = prepare_encoder_params(params, n_features, embedding_dim)
    packed = jax.tree_util.tree_map(jax.block_until_ready, packed)

    out = encoder_forward(x, packed, seq_len, n_features, embedding_dim)
    out = jax.block_until_ready(out)

    ref = encoder_ref(x, params, seq_len, n_features, embedding_dim)
    assert out.shape == (1, embedding_dim)
    assert jnp.allclose(out, ref, atol=1e-5, rtol=1e-5), "mismatch vs. pure-JAX reference"

    print("KERNEL_OK")
</pallas_src>

<mosaic_0001>
module attributes {stable_mosaic.version = 11 : i64} {
  func.func @_encoder_kernel(%arg0: memref<8x4xf32, #tpu.memory_space<vmem>>, %arg1: memref<4x512xf32, #tpu.memory_space<vmem>>, %arg2: memref<1x512xf32, #tpu.memory_space<vmem>>, %arg3: memref<160x640xf32, #tpu.memory_space<vmem>>, %arg4: memref<1x128xf32, #tpu.memory_space<vmem>>, %arg5: memref<1x128xf32, #tpu.memory_space<vmem>>) attributes {dimension_semantics = [], scalar_prefetch = 0 : i64, scratch_operands = 0 : i64, tpu.core_type = #tpu.core_type<tc>} {
    %c0 = arith.constant 0 : index
    %c0_0 = arith.constant 0 : index
    %0 = vector.load %arg0[%c0, %c0_0] : memref<8x4xf32, #tpu.memory_space<vmem>>, vector<8x4xf32>
    %c0_1 = arith.constant 0 : index
    %c0_2 = arith.constant 0 : index
    %1 = vector.load %arg1[%c0_1, %c0_2] : memref<4x512xf32, #tpu.memory_space<vmem>>, vector<4x512xf32>
    %cst = arith.constant dense<0.000000e+00> : vector<8x512xf32>
    %2 = tpu.matmul %0, %1, %cst {dimension_numbers = #tpu.dot_dimension_numbers<[1], [0], [0], [1], [0, 0, 1, 1], [], []>} : vector<8x4xf32>, vector<4x512xf32>, vector<8x512xf32> -> vector<8x512xf32>
    %c0_3 = arith.constant 0 : index
    %c0_4 = arith.constant 0 : index
    %3 = vector.load %arg2[%c0_3, %c0_4] : memref<1x512xf32, #tpu.memory_space<vmem>>, vector<1x512xf32>
    %4 = vector.broadcast %3 : vector<1x512xf32> to vector<8x512xf32>
    %5 = arith.addf %2, %4 : vector<8x512xf32>
    %c0_5 = arith.constant 0 : index
    %c0_6 = arith.constant 0 : index
    %6 = vector.load %arg4[%c0_5, %c0_6] : memref<1x128xf32, #tpu.memory_space<vmem>>, vector<1x128xf32>
    %7 = vector.extract_strided_slice %5 {offsets = [0, 0], sizes = [1, 512], strides = [1, 1]} : vector<8x512xf32> to vector<1x512xf32>
    %cst_7 = arith.constant 0.000000e+00 : f32
    %8 = vector.broadcast %cst_7 : f32 to vector<1x128xf32>
    %9 = vector.extract_strided_slice %7 {offsets = [0, 0], sizes = [1, 384], strides = [1, 1]} : vector<1x512xf32> to vector<1x384xf32>
    %10 = arith.negf %9 : vector<1x384xf32>
    %11 = math.exp %10 : vector<1x384xf32>
    %cst_8 = arith.constant 1.000000e+00 : f32
    %12 = vector.broadcast %cst_8 : f32 to vector<1x384xf32>
    %13 = arith.addf %12, %11 : vector<1x384xf32>
    %14 = arith.divf %12, %13 : vector<1x384xf32>
    %15 = vector.extract_strided_slice %14 {offsets = [0, 0], sizes = [1, 128], strides = [1, 1]} : vector<1x384xf32> to vector<1x128xf32>
    %16 = vector.extract_strided_slice %14 {offsets = [0, 128], sizes = [1, 128], strides = [1, 1]} : vector<1x384xf32> to vector<1x128xf32>
    %17 = vector.extract_strided_slice %14 {offsets = [0, 256], sizes = [1, 128], strides = [1, 1]} : vector<1x384xf32> to vector<1x128xf32>
    %18 = vector.extract_strided_slice %7 {offsets = [0, 384], sizes = [1, 128], strides = [1, 1]} : vector<1x512xf32> to vector<1x128xf32>
    %19 = math.tanh %18 : vector<1x128xf32>
    %20 = arith.mulf %16, %8 : vector<1x128xf32>
    %21 = arith.mulf %15, %19 : vector<1x128xf32>
    %22 = arith.addf %20, %21 : vector<1x128xf32>
    %23 = math.tanh %22 : vector<1x128xf32>
    %24 = arith.mulf %17, %23 : vector<1x128xf32>
    %cst_9 = arith.constant 0.000000e+00 : f32
    %25 = vector.broadcast %cst_9 : f32 to vector<1x32xf32>
    %cst_10 = arith.constant 0.000000e+00 : f32
    %26 = vector.broadcast %cst_10 : f32 to vector<1x32xf32>
    %27 = tpu.concatenate %24, %25 in 1 : vector<1x128xf32>, vector<1x32xf32> -> vector<1x160xf32>
    %c0_11 = arith.constant 0 : index
    %c0_12 = arith.constant 0 : index
    %28 = vector.load %arg3[%c0_11, %c0_12] : memref<160x640xf32, #tpu.memory_space<vmem>>, vector<160x640xf32>
    %cst_13 = arith.constant dense<0.000000e+00> : vector<1x640xf32>
    %29 = tpu.matmul %27, %28, %cst_13 {dimension_numbers = #tpu.dot_dimension_numbers<[1], [0], [0], [1], [0, 0, 1, 1], [], []>} : vector<1x160xf32>, vector<160x640xf32>, vector<1x640xf32> -> vector<1x640xf32>
    %30 = vector.extract_strided_slice %5 {offsets = [1, 0], sizes = [1, 512], strides = [1, 1]} : vector<8x512xf32> to vector<1x512xf32>
    %31 = vector.extract_strided_slice %29 {offsets = [0, 0], sizes = [1, 512], strides = [1, 1]} : vector<1x640xf32> to vector<1x512xf32>
    %32 = arith.addf %30, %31 : vector<1x512xf32>
    %33 = vector.extract_strided_slice %29 {offsets = [0, 512], sizes = [1, 128], strides = [1, 1]} : vector<1x640xf32> to vector<1x128xf32>
    %34 = arith.addf %33, %6 : vector<1x128xf32>
    %35 = vector.extract_strided_slice %32 {offsets = [0, 0], sizes = [1, 384], strides = [1, 1]} : vector<1x512xf32> to vector<1x384xf32>
    %36 = arith.negf %35 : vector<1x384xf32>
    %37 = math.exp %36 : vector<1x384xf32>
    %cst_14 = arith.constant 1.000000e+00 : f32
    %38 = vector.broadcast %cst_14 : f32 to vector<1x384xf32>
    %39 = arith.addf %38, %37 : vector<1x384xf32>
    %40 = arith.divf %38, %39 : vector<1x384xf32>
    %41 = vector.extract_strided_slice %40 {offsets = [0, 0], sizes = [1, 128], strides = [1, 1]} : vector<1x384xf32> to vector<1x128xf32>
    %42 = vector.extract_strided_slice %40 {offsets = [0, 128], sizes = [1, 128], strides = [1, 1]} : vector<1x384xf32> to vector<1x128xf32>
    %43 = vector.extract_strided_slice %40 {offsets = [0, 256], sizes = [1, 128], strides = [1, 1]} : vector<1x384xf32> to vector<1x128xf32>
    %44 = vector.extract_strided_slice %32 {offsets = [0, 384], sizes = [1, 128], strides = [1, 1]} : vector<1x512xf32> to vector<1x128xf32>
    %45 = math.tanh %44 : vector<1x128xf32>
    %46 = arith.mulf %42, %22 : vector<1x128xf32>
    %47 = arith.mulf %41, %45 : vector<1x128xf32>
    %48 = arith.addf %46, %47 : vector<1x128xf32>
    %49 = math.tanh %48 : vector<1x128xf32>
    %50 = arith.mulf %43, %49 : vector<1x128xf32>
    %51 = vector.extract_strided_slice %34 {offsets = [0, 0], sizes = [1, 96], strides = [1, 1]} : vector<1x128xf32> to vector<1x96xf32>
    %52 = arith.negf %51 : vector<1x96xf32>
    %53 = math.exp %52 : vector<1x96xf32>
    %cst_15 = arith.constant 1.000000e+00 : f32
    %54 = vector.broadcast %cst_15 : f32 to vector<1x96xf32>
    %55 = arith.addf %54, %53 : vector<1x96xf32>
    %56 = arith.divf %54, %55 : vector<1x96xf32>
    %57 = vector.extract_strided_slice %56 {offsets = [0, 0], sizes = [1, 32], strides = [1, 1]} : vector<1x96xf32> to vector<1x32xf32>
    %58 = vector.extract_strided_slice %56 {offsets = [0, 32], sizes = [1, 32], strides = [1, 1]} : vector<1x96xf32> to vector<1x32xf32>
    %59 = vector.extract_strided_slice %56 {offsets = [0, 64], sizes = [1, 32], strides = [1, 1]} : vector<1x96xf32> to vector<1x32xf32>
    %60 = vector.extract_strided_slice %34 {offsets = [0, 96], sizes = [1, 32], strides = [1, 1]} : vector<1x128xf32> to vector<1x32xf32>
    %61 = math.tanh %60 : vector<1x32xf32>
    %62 = arith.mulf %58, %26 : vector<1x32xf32>
    %63 = arith.mulf %57, %61 : vector<1x32xf32>
    %64 = arith.addf %62, %63 : vector<1x32xf32>
    %65 = math.tanh %64 : vector<1x32xf32>
    %66 = arith.mulf %59, %65 : vector<1x32xf32>
    %67 = tpu.concatenate %50, %66 in 1 : vector<1x128xf32>, vector<1x32xf32> -> vector<1x160xf32>
    %c0_16 = arith.constant 0 : index
    %c0_17 = arith.constant 0 : index
    %68 = vector.load %arg3[%c0_16, %c0_17] : memref<160x640xf32, #tpu.memory_space<vmem>>, vector<160x640xf32>
    %cst_18 = arith.constant dense<0.000000e+00> : vector<1x640xf32>
    %69 = tpu.matmul %67, %68, %cst_18 {dimension_numbers = #tpu.dot_dimension_numbers<[1], [0], [0], [1], [0, 0, 1, 1], [], []>} : vector<1x160xf32>, vector<160x640xf32>, vector<1x640xf32> -> vector<1x640xf32>
    %70 = vector.extract_strided_slice %5 {offsets = [2, 0], sizes = [1, 512], strides = [1, 1]} : vector<8x512xf32> to vector<1x512xf32>
    %71 = vector.extract_strided_slice %69 {offsets = [0, 0], sizes = [1, 512], strides = [1, 1]} : vector<1x640xf32> to vector<1x512xf32>
    %72 = arith.addf %70, %71 : vector<1x512xf32>
    %73 = vector.extract_strided_slice %69 {offsets = [0, 512], sizes = [1, 128], strides = [1, 1]} : vector<1x640xf32> to vector<1x128xf32>
    %74 = arith.addf %73, %6 : vector<1x128xf32>
    %75 = vector.extract_strided_slice %72 {offsets = [0, 0], sizes = [1, 384], strides = [1, 1]} : vector<1x512xf32> to vector<1x384xf32>
    %76 = arith.negf %75 : vector<1x384xf32>
    %77 = math.exp %76 : vector<1x384xf32>
    %cst_19 = arith.constant 1.000000e+00 : f32
    %78 = vector.broadcast %cst_19 : f32 to vector<1x384xf32>
    %79 = arith.addf %78, %77 : vector<1x384xf32>
    %80 = arith.divf %78, %79 : vector<1x384xf32>
    %81 = vector.extract_strided_slice %80 {offsets = [0, 0], sizes = [1, 128], strides = [1, 1]} : vector<1x384xf32> to vector<1x128xf32>
    %82 = vector.extract_strided_slice %80 {offsets = [0, 128], sizes = [1, 128], strides = [1, 1]} : vector<1x384xf32> to vector<1x128xf32>
    %83 = vector.extract_strided_slice %80 {offsets = [0, 256], sizes = [1, 128], strides = [1, 1]} : vector<1x384xf32> to vector<1x128xf32>
    %84 = vector.extract_strided_slice %72 {offsets = [0, 384], sizes = [1, 128], strides = [1, 1]} : vector<1x512xf32> to vector<1x128xf32>
    %85 = math.tanh %84 : vector<1x128xf32>
    %86 = arith.mulf %82, %48 : vector<1x128xf32>
    %87 = arith.mulf %81, %85 : vector<1x128xf32>
    %88 = arith.addf %86, %87 : vector<1x128xf32>
    %89 = math.tanh %88 : vector<1x128xf32>
    %90 = arith.mulf %83, %89 : vector<1x128xf32>
    %91 = vector.extract_strided_slice %74 {offsets = [0, 0], sizes = [1, 96], strides = [1, 1]} : vector<1x128xf32> to vector<1x96xf32>
    %92 = arith.negf %91 : vector<1x96xf32>
    %93 = math.exp %92 : vector<1x96xf32>
    %cst_20 = arith.constant 1.000000e+00 : f32
    %94 = vector.broadcast %cst_20 : f32 to vector<1x96xf32>
    %95 = arith.addf %94, %93 : vector<1x96xf32>
    %96 = arith.divf %94, %95 : vector<1x96xf32>
    %97 = vector.extract_strided_slice %96 {offsets = [0, 0], sizes = [1, 32], strides = [1, 1]} : vector<1x96xf32> to vector<1x32xf32>
    %98 = vector.extract_strided_slice %96 {offsets = [0, 32], sizes = [1, 32], strides = [1, 1]} : vector<1x96xf32> to vector<1x32xf32>
    %99 = vector.extract_strided_slice %96 {offsets = [0, 64], sizes = [1, 32], strides = [1, 1]} : vector<1x96xf32> to vector<1x32xf32>
    %100 = vector.extract_strided_slice %74 {offsets = [0, 96], sizes = [1, 32], strides = [1, 1]} : vector<1x128xf32> to vector<1x32xf32>
    %101 = math.tanh %100 : vector<1x32xf32>
    %102 = arith.mulf %98, %64 : vector<1x32xf32>
    %103 = arith.mulf %97, %101 : vector<1x32xf32>
    %104 = arith.addf %102, %103 : vector<1x32xf32>
    %105 = math.tanh %104 : vector<1x32xf32>
    %106 = arith.mulf %99, %105 : vector<1x32xf32>
    %107 = tpu.concatenate %90, %106 in 1 : vector<1x128xf32>, vector<1x32xf32> -> vector<1x160xf32>
    %c0_21 = arith.constant 0 : index
    %c0_22 = arith.constant 0 : index
    %108 = vector.load %arg3[%c0_21, %c0_22] : memref<160x640xf32, #tpu.memory_space<vmem>>, vector<160x640xf32>
    %cst_23 = arith.constant dense<0.000000e+00> : vector<1x640xf32>
    %109 = tpu.matmul %107, %108, %cst_23 {dimension_numbers = #tpu.dot_dimension_numbers<[1], [0], [0], [1], [0, 0, 1, 1], [], []>} : vector<1x160xf32>, vector<160x640xf32>, vector<1x640xf32> -> vector<1x640xf32>
    %110 = vector.extract_strided_slice %5 {offsets = [3, 0], sizes = [1, 512], strides = [1, 1]} : vector<8x512xf32> to vector<1x512xf32>
    %111 = vector.extract_strided_slice %109 {offsets = [0, 0], sizes = [1, 512], strides = [1, 1]} : vector<1x640xf32> to vector<1x512xf32>
    %112 = arith.addf %110, %111 : vector<1x512xf32>
    %113 = vector.extract_strided_slice %109 {offsets = [0, 512], sizes = [1, 128], strides = [1, 1]} : vector<1x640xf32> to vector<1x128xf32>
    %114 = arith.addf %113, %6 : vector<1x128xf32>
    %115 = vector.extract_strided_slice %112 {offsets = [0, 0], sizes = [1, 384], strides = [1, 1]} : vector<1x512xf32> to vector<1x384xf32>
    %116 = arith.negf %115 : vector<1x384xf32>
    %117 = math.exp %116 : vector<1x384xf32>
    %cst_24 = arith.constant 1.000000e+00 : f32
    %118 = vector.broadcast %cst_24 : f32 to vector<1x384xf32>
    %119 = arith.addf %118, %117 : vector<1x384xf32>
    %120 = arith.divf %118, %119 : vector<1x384xf32>
    %121 = vector.extract_strided_slice %120 {offsets = [0, 0], sizes = [1, 128], strides = [1, 1]} : vector<1x384xf32> to vector<1x128xf32>
    %122 = vector.extract_strided_slice %120 {offsets = [0, 128], sizes = [1, 128], strides = [1, 1]} : vector<1x384xf32> to vector<1x128xf32>
    %123 = vector.extract_strided_slice %120 {offsets = [0, 256], sizes = [1, 128], strides = [1, 1]} : vector<1x384xf32> to vector<1x128xf32>
    %124 = vector.extract_strided_slice %112 {offsets = [0, 384], sizes = [1, 128], strides = [1, 1]} : vector<1x512xf32> to vector<1x128xf32>
    %125 = math.tanh %124 : vector<1x128xf32>
    %126 = arith.mulf %122, %88 : vector<1x128xf32>
    %127 = arith.mulf %121, %125 : vector<1x128xf32>
    %128 = arith.addf %126, %127 : vector<1x128xf32>
    %129 = math.tanh %128 : vector<1x128xf32>
    %130 = arith.mulf %123, %129 : vector<1x128xf32>
    %131 = vector.extract_strided_slice %114 {offsets = [0, 0], sizes = [1, 96], strides = [1, 1]} : vector<1x128xf32> to vector<1x96xf32>
    %132 = arith.negf %131 : vector<1x96xf32>
    %133 = math.exp %132 : vector<1x96xf32>
    %cst_25 = arith.constant 1.000000e+00 : f32
    %134 = vector.broadcast %cst_25 : f32 to vector<1x96xf32>
    %135 = arith.addf %134, %133 : vector<1x96xf32>
    %136 = arith.divf %134, %135 : vector<1x96xf32>
    %137 = vector.extract_strided_slice %136 {offsets = [0, 0], sizes = [1, 32], strides = [1, 1]} : vector<1x96xf32> to vector<1x32xf32>
    %138 = vector.extract_strided_slice %136 {offsets = [0, 32], sizes = [1, 32], strides = [1, 1]} : vector<1x96xf32> to vector<1x32xf32>
    %139 = vector.extract_strided_slice %136 {offsets = [0, 64], sizes = [1, 32], strides = [1, 1]} : vector<1x96xf32> to vector<1x32xf32>
    %140 = vector.extract_strided_slice %114 {offsets = [0, 96], sizes = [1, 32], strides = [1, 1]} : vector<1x128xf32> to vector<1x32xf32>
    %141 = math.tanh %140 : vector<1x32xf32>
    %142 = arith.mulf %138, %104 : vector<1x32xf32>
    %143 = arith.mulf %137, %141 : vector<1x32xf32>
    %144 = arith.addf %142, %143 : vector<1x32xf32>
    %145 = math.tanh %144 : vector<1x32xf32>
    %146 = arith.mulf %139, %145 : vector<1x32xf32>
    %147 = tpu.concatenate %130, %146 in 1 : vector<1x128xf32>, vector<1x32xf32> -> vector<1x160xf32>
    %c0_26 = arith.constant 0 : index
    %c0_27 = arith.constant 0 : index
    %148 = vector.load %arg3[%c0_26, %c0_27] : memref<160x640xf32, #tpu.memory_space<vmem>>, vector<160x640xf32>
    %cst_28 = arith.constant dense<0.000000e+00> : vector<1x640xf32>
    %149 = tpu.matmul %147, %148, %cst_28 {dimension_numbers = #tpu.dot_dimension_numbers<[1], [0], [0], [1], [0, 0, 1, 1], [], []>} : vector<1x160xf32>, vector<160x640xf32>, vector<1x640xf32> -> vector<1x640xf32>
    %150 = vector.extract_strided_slice %5 {offsets = [4, 0], sizes = [1, 512], strides = [1, 1]} : vector<8x512xf32> to vector<1x512xf32>
    %151 = vector.extract_strided_slice %149 {offsets = [0, 0], sizes = [1, 512], strides = [1, 1]} : vector<1x640xf32> to vector<1x512xf32>
    %152 = arith.addf %150, %151 : vector<1x512xf32>
    %153 = vector.extract_strided_slice %149 {offsets = [0, 512], sizes = [1, 128], strides = [1, 1]} : vector<1x640xf32> to vector<1x128xf32>
    %154 = arith.addf %153, %6 : vector<1x128xf32>
    %155 = vector.extract_strided_slice %152 {offsets = [0, 0], sizes = [1, 384], strides = [1, 1]} : vector<1x512xf32> to vector<1x384xf32>
    %156 = arith.negf %155 : vector<1x384xf32>
    %157 = math.exp %156 : vector<1x384xf32>
    %cst_29 = arith.constant 1.000000e+00 : f32
    %158 = vector.broadcast %cst_29 : f32 to vector<1x384xf32>
    %159 = arith.addf %158, %157 : vector<1x384xf32>
    %160 = arith.divf %158, %159 : vector<1x384xf32>
    %161 = vector.extract_strided_slice %160 {offsets = [0, 0], sizes = [1, 128], strides = [1, 1]} : vector<1x384xf32> to vector<1x128xf32>
    %162 = vector.extract_strided_slice %160 {offsets = [0, 128], sizes = [1, 128], strides = [1, 1]} : vector<1x384xf32> to vector<1x128xf32>
    %163 = vector.extract_strided_slice %160 {offsets = [0, 256], sizes = [1, 128], strides = [1, 1]} : vector<1x384xf32> to vector<1x128xf32>
    %164 = vector.extract_strided_slice %152 {offsets = [0, 384], sizes = [1, 128], strides = [1, 1]} : vector<1x512xf32> to vector<1x128xf32>
    %165 = math.tanh %164 : vector<1x128xf32>
    %166 = arith.mulf %162, %128 : vector<1x128xf32>
    %167 = arith.mulf %161, %165 : vector<1x128xf32>
    %168 = arith.addf %166, %167 : vector<1x128xf32>
    %169 = math.tanh %168 : vector<1x128xf32>
    %170 = arith.mulf %163, %169 : vector<1x128xf32>
    %171 = vector.extract_strided_slice %154 {offsets = [0, 0], sizes = [1, 96], strides = [1, 1]} : vector<1x128xf32> to vector<1x96xf32>
    %172 = arith.negf %171 : vector<1x96xf32>
    %173 = math.exp %172 : vector<1x96xf32>
    %cst_30 = arith.constant 1.000000e+00 : f32
    %174 = vector.broadcast %cst_30 : f32 to vector<1x96xf32>
    %175 = arith.addf %174, %173 : vector<1x96xf32>
    %176 = arith.divf %174, %175 : vector<1x96xf32>
    %177 = vector.extract_strided_slice %176 {offsets = [0, 0], sizes = [1, 32], strides = [1, 1]} : vector<1x96xf32> to vector<1x32xf32>
    %178 = vector.extract_strided_slice %176 {offsets = [0, 32], sizes = [1, 32], strides = [1, 1]} : vector<1x96xf32> to vector<1x32xf32>
    %179 = vector.extract_strided_slice %176 {offsets = [0, 64], sizes = [1, 32], strides = [1, 1]} : vector<1x96xf32> to vector<1x32xf32>
    %180 = vector.extract_strided_slice %154 {offsets = [0, 96], sizes = [1, 32], strides = [1, 1]} : vector<1x128xf32> to vector<1x32xf32>
    %181 = math.tanh %180 : vector<1x32xf32>
    %182 = arith.mulf %178, %144 : vector<1x32xf32>
    %183 = arith.mulf %177, %181 : vector<1x32xf32>
    %184 = arith.addf %182, %183 : vector<1x32xf32>
    %185 = math.tanh %184 : vector<1x32xf32>
    %186 = arith.mulf %179, %185 : vector<1x32xf32>
    %187 = tpu.concatenate %170, %186 in 1 : vector<1x128xf32>, vector<1x32xf32> -> vector<1x160xf32>
    %c0_31 = arith.constant 0 : index
    %c0_32 = arith.constant 0 : index
    %188 = vector.load %arg3[%c0_31, %c0_32] : memref<160x640xf32, #tpu.memory_space<vmem>>, vector<160x640xf32>
    %cst_33 = arith.constant dense<0.000000e+00> : vector<1x640xf32>
    %189 = tpu.matmul %187, %188, %cst_33 {dimension_numbers = #tpu.dot_dimension_numbers<[1], [0], [0], [1], [0, 0, 1, 1], [], []>} : vector<1x160xf32>, vector<160x640xf32>, vector<1x640xf32> -> vector<1x640xf32>
    %190 = vector.extract_strided_slice %5 {offsets = [5, 0], sizes = [1, 512], strides = [1, 1]} : vector<8x512xf32> to vector<1x512xf32>
    %191 = vector.extract_strided_slice %189 {offsets = [0, 0], sizes = [1, 512], strides = [1, 1]} : vector<1x640xf32> to vector<1x512xf32>
    %192 = arith.addf %190, %191 : vector<1x512xf32>
    %193 = vector.extract_strided_slice %189 {offsets = [0, 512], sizes = [1, 128], strides = [1, 1]} : vector<1x640xf32> to vector<1x128xf32>
    %194 = arith.addf %193, %6 : vector<1x128xf32>
    %195 = vector.extract_strided_slice %192 {offsets = [0, 0], sizes = [1, 384], strides = [1, 1]} : vector<1x512xf32> to vector<1x384xf32>
    %196 = arith.negf %195 : vector<1x384xf32>
    %197 = math.exp %196 : vector<1x384xf32>
    %cst_34 = arith.constant 1.000000e+00 : f32
    %198 = vector.broadcast %cst_34 : f32 to vector<1x384xf32>
    %199 = arith.addf %198, %197 : vector<1x384xf32>
    %200 = arith.divf %198, %199 : vector<1x384xf32>
    %201 = vector.extract_strided_slice %200 {offsets = [0, 0], sizes = [1, 128], strides = [1, 1]} : vector<1x384xf32> to vector<1x128xf32>
    %202 = vector.extract_strided_slice %200 {offsets = [0, 128], sizes = [1, 128], strides = [1, 1]} : vector<1x384xf32> to vector<1x128xf32>
    %203 = vector.extract_strided_slice %200 {offsets = [0, 256], sizes = [1, 128], strides = [1, 1]} : vector<1x384xf32> to vector<1x128xf32>
    %204 = vector.extract_strided_slice %192 {offsets = [0, 384], sizes = [1, 128], strides = [1, 1]} : vector<1x512xf32> to vector<1x128xf32>
    %205 = math.tanh %204 : vector<1x128xf32>
    %206 = arith.mulf %202, %168 : vector<1x128xf32>
    %207 = arith.mulf %201, %205 : vector<1x128xf32>
    %208 = arith.addf %206, %207 : vector<1x128xf32>
    %209 = math.tanh %208 : vector<1x128xf32>
    %210 = arith.mulf %203, %209 : vector<1x128xf32>
    %211 = vector.extract_strided_slice %194 {offsets = [0, 0], sizes = [1, 96], strides = [1, 1]} : vector<1x128xf32> to vector<1x96xf32>
    %212 = arith.negf %211 : vector<1x96xf32>
    %213 = math.exp %212 : vector<1x96xf32>
    %cst_35 = arith.constant 1.000000e+00 : f32
    %214 = vector.broadcast %cst_35 : f32 to vector<1x96xf32>
    %215 = arith.addf %214, %213 : vector<1x96xf32>
    %216 = arith.divf %214, %215 : vector<1x96xf32>
    %217 = vector.extract_strided_slice %216 {offsets = [0, 0], sizes = [1, 32], strides = [1, 1]} : vector<1x96xf32> to vector<1x32xf32>
    %218 = vector.extract_strided_slice %216 {offsets = [0, 32], sizes = [1, 32], strides = [1, 1]} : vector<1x96xf32> to vector<1x32xf32>
    %219 = vector.extract_strided_slice %216 {offsets = [0, 64], sizes = [1, 32], strides = [1, 1]} : vector<1x96xf32> to vector<1x32xf32>
    %220 = vector.extract_strided_slice %194 {offsets = [0, 96], sizes = [1, 32], strides = [1, 1]} : vector<1x128xf32> to vector<1x32xf32>
    %221 = math.tanh %220 : vector<1x32xf32>
    %222 = arith.mulf %218, %184 : vector<1x32xf32>
    %223 = arith.mulf %217, %221 : vector<1x32xf32>
    %224 = arith.addf %222, %223 : vector<1x32xf32>
    %225 = math.tanh %224 : vector<1x32xf32>
    %226 = arith.mulf %219, %225 : vector<1x32xf32>
    %227 = tpu.concatenate %210, %226 in 1 : vector<1x128xf32>, vector<1x32xf32> -> vector<1x160xf32>
    %c0_36 = arith.constant 0 : index
    %c0_37 = arith.constant 0 : index
    %228 = vector.load %arg3[%c0_36, %c0_37] : memref<160x640xf32, #tpu.memory_space<vmem>>, vector<160x640xf32>
    %cst_38 = arith.constant dense<0.000000e+00> : vector<1x640xf32>
    %229 = tpu.matmul %227, %228, %cst_38 {dimension_numbers = #tpu.dot_dimension_numbers<[1], [0], [0], [1], [0, 0, 1, 1], [], []>} : vector<1x160xf32>, vector<160x640xf32>, vector<1x640xf32> -> vector<1x640xf32>
    %230 = vector.extract_strided_slice %5 {offsets = [6, 0], sizes = [1, 512], strides = [1, 1]} : vector<8x512xf32> to vector<1x512xf32>
    %231 = vector.extract_strided_slice %229 {offsets = [0, 0], sizes = [1, 512], strides = [1, 1]} : vector<1x640xf32> to vector<1x512xf32>
    %232 = arith.addf %230, %231 : vector<1x512xf32>
    %233 = vector.extract_strided_slice %229 {offsets = [0, 512], sizes = [1, 128], strides = [1, 1]} : vector<1x640xf32> to vector<1x128xf32>
    %234 = arith.addf %233, %6 : vector<1x128xf32>
    %235 = vector.extract_strided_slice %232 {offsets = [0, 0], sizes = [1, 384], strides = [1, 1]} : vector<1x512xf32> to vector<1x384xf32>
    %236 = arith.negf %235 : vector<1x384xf32>
    %237 = math.exp %236 : vector<1x384xf32>
    %cst_39 = arith.constant 1.000000e+00 : f32
    %238 = vector.broadcast %cst_39 : f32 to vector<1x384xf32>
    %239 = arith.addf %238, %237 : vector<1x384xf32>
    %240 = arith.divf %238, %239 : vector<1x384xf32>
    %241 = vector.extract_strided_slice %240 {offsets = [0, 0], sizes = [1, 128], strides = [1, 1]} : vector<1x384xf32> to vector<1x128xf32>
    %242 = vector.extract_strided_slice %240 {offsets = [0, 128], sizes = [1, 128], strides = [1, 1]} : vector<1x384xf32> to vector<1x128xf32>
    %243 = vector.extract_strided_slice %240 {offsets = [0, 256], sizes = [1, 128], strides = [1, 1]} : vector<1x384xf32> to vector<1x128xf32>
    %244 = vector.extract_strided_slice %232 {offsets = [0, 384], sizes = [1, 128], strides = [1, 1]} : vector<1x512xf32> to vector<1x128xf32>
    %245 = math.tanh %244 : vector<1x128xf32>
    %246 = arith.mulf %242, %208 : vector<1x128xf32>
    %247 = arith.mulf %241, %245 : vector<1x128xf32>
    %248 = arith.addf %246, %247 : vector<1x128xf32>
    %249 = math.tanh %248 : vector<1x128xf32>
    %250 = arith.mulf %243, %249 : vector<1x128xf32>
    %251 = vector.extract_strided_slice %234 {offsets = [0, 0], sizes = [1, 96], strides = [1, 1]} : vector<1x128xf32> to vector<1x96xf32>
    %252 = arith.negf %251 : vector<1x96xf32>
    %253 = math.exp %252 : vector<1x96xf32>
    %cst_40 = arith.constant 1.000000e+00 : f32
    %254 = vector.broadcast %cst_40 : f32 to vector<1x96xf32>
    %255 = arith.addf %254, %253 : vector<1x96xf32>
    %256 = arith.divf %254, %255 : vector<1x96xf32>
    %257 = vector.extract_strided_slice %256 {offsets = [0, 0], sizes = [1, 32], strides = [1, 1]} : vector<1x96xf32> to vector<1x32xf32>
    %258 = vector.extract_strided_slice %256 {offsets = [0, 32], sizes = [1, 32], strides = [1, 1]} : vector<1x96xf32> to vector<1x32xf32>
    %259 = vector.extract_strided_slice %256 {offsets = [0, 64], sizes = [1, 32], strides = [1, 1]} : vector<1x96xf32> to vector<1x32xf32>
    %260 = vector.extract_strided_slice %234 {offsets = [0, 96], sizes = [1, 32], strides = [1, 1]} : vector<1x128xf32> to vector<1x32xf32>
    %261 = math.tanh %260 : vector<1x32xf32>
    %262 = arith.mulf %258, %224 : vector<1x32xf32>
    %263 = arith.mulf %257, %261 : vector<1x32xf32>
    %264 = arith.addf %262, %263 : vector<1x32xf32>
    %265 = math.tanh %264 : vector<1x32xf32>
    %266 = arith.mulf %259, %265 : vector<1x32xf32>
    %267 = tpu.concatenate %250, %266 in 1 : vector<1x128xf32>, vector<1x32xf32> -> vector<1x160xf32>
    %c0_41 = arith.constant 0 : index
    %c0_42 = arith.constant 0 : index
    %268 = vector.load %arg3[%c0_41, %c0_42] : memref<160x640xf32, #tpu.memory_space<vmem>>, vector<160x640xf32>
    %cst_43 = arith.constant dense<0.000000e+00> : vector<1x640xf32>
    %269 = tpu.matmul %267, %268, %cst_43 {dimension_numbers = #tpu.dot_dimension_numbers<[1], [0], [0], [1], [0, 0, 1, 1], [], []>} : vector<1x160xf32>, vector<160x640xf32>, vector<1x640xf32> -> vector<1x640xf32>
    %270 = vector.extract_strided_slice %5 {offsets = [7, 0], sizes = [1, 512], strides = [1, 1]} : vector<8x512xf32> to vector<1x512xf32>
    %271 = vector.extract_strided_slice %269 {offsets = [0, 0], sizes = [1, 512], strides = [1, 1]} : vector<1x640xf32> to vector<1x512xf32>
    %272 = arith.addf %270, %271 : vector<1x512xf32>
    %273 = vector.extract_strided_slice %269 {offsets = [0, 512], sizes = [1, 128], strides = [1, 1]} : vector<1x640xf32> to vector<1x128xf32>
    %274 = arith.addf %273, %6 : vector<1x128xf32>
    %275 = vector.extract_strided_slice %272 {offsets = [0, 0], sizes = [1, 384], strides = [1, 1]} : vector<1x512xf32> to vector<1x384xf32>
    %276 = arith.negf %275 : vector<1x384xf32>
    %277 = math.exp %276 : vector<1x384xf32>
    %cst_44 = arith.constant 1.000000e+00 : f32
    %278 = vector.broadcast %cst_44 : f32 to vector<1x384xf32>
    %279 = arith.addf %278, %277 : vector<1x384xf32>
    %280 = arith.divf %278, %279 : vector<1x384xf32>
    %281 = vector.extract_strided_slice %280 {offsets = [0, 0], sizes = [1, 128], strides = [1, 1]} : vector<1x384xf32> to vector<1x128xf32>
    %282 = vector.extract_strided_slice %280 {offsets = [0, 128], sizes = [1, 128], strides = [1, 1]} : vector<1x384xf32> to vector<1x128xf32>
    %283 = vector.extract_strided_slice %280 {offsets = [0, 256], sizes = [1, 128], strides = [1, 1]} : vector<1x384xf32> to vector<1x128xf32>
    %284 = vector.extract_strided_slice %272 {offsets = [0, 384], sizes = [1, 128], strides = [1, 1]} : vector<1x512xf32> to vector<1x128xf32>
    %285 = math.tanh %284 : vector<1x128xf32>
    %286 = arith.mulf %282, %248 : vector<1x128xf32>
    %287 = arith.mulf %281, %285 : vector<1x128xf32>
    %288 = arith.addf %286, %287 : vector<1x128xf32>
    %289 = math.tanh %288 : vector<1x128xf32>
    %290 = arith.mulf %283, %289 : vector<1x128xf32>
    %291 = vector.extract_strided_slice %274 {offsets = [0, 0], sizes = [1, 96], strides = [1, 1]} : vector<1x128xf32> to vector<1x96xf32>
    %292 = arith.negf %291 : vector<1x96xf32>
    %293 = math.exp %292 : vector<1x96xf32>
    %cst_45 = arith.constant 1.000000e+00 : f32
    %294 = vector.broadcast %cst_45 : f32 to vector<1x96xf32>
    %295 = arith.addf %294, %293 : vector<1x96xf32>
    %296 = arith.divf %294, %295 : vector<1x96xf32>
    %297 = vector.extract_strided_slice %296 {offsets = [0, 0], sizes = [1, 32], strides = [1, 1]} : vector<1x96xf32> to vector<1x32xf32>
    %298 = vector.extract_strided_slice %296 {offsets = [0, 32], sizes = [1, 32], strides = [1, 1]} : vector<1x96xf32> to vector<1x32xf32>
    %299 = vector.extract_strided_slice %296 {offsets = [0, 64], sizes = [1, 32], strides = [1, 1]} : vector<1x96xf32> to vector<1x32xf32>
    %300 = vector.extract_strided_slice %274 {offsets = [0, 96], sizes = [1, 32], strides = [1, 1]} : vector<1x128xf32> to vector<1x32xf32>
    %301 = math.tanh %300 : vector<1x32xf32>
    %302 = arith.mulf %298, %264 : vector<1x32xf32>
    %303 = arith.mulf %297, %301 : vector<1x32xf32>
    %304 = arith.addf %302, %303 : vector<1x32xf32>
    %305 = math.tanh %304 : vector<1x32xf32>
    %306 = arith.mulf %299, %305 : vector<1x32xf32>
    %307 = tpu.concatenate %290, %306 in 1 : vector<1x128xf32>, vector<1x32xf32> -> vector<1x160xf32>
    %c0_46 = arith.constant 0 : index
    %c0_47 = arith.constant 0 : index
    %308 = vector.load %arg3[%c0_46, %c0_47] : memref<160x640xf32, #tpu.memory_space<vmem>>, vector<160x640xf32>
    %cst_48 = arith.constant dense<0.000000e+00> : vector<1x640xf32>
    %309 = tpu.matmul %307, %308, %cst_48 {dimension_numbers = #tpu.dot_dimension_numbers<[1], [0], [0], [1], [0, 0, 1, 1], [], []>} : vector<1x160xf32>, vector<160x640xf32>, vector<1x640xf32> -> vector<1x640xf32>
    %310 = vector.extract_strided_slice %309 {offsets = [0, 512], sizes = [1, 128], strides = [1, 1]} : vector<1x640xf32> to vector<1x128xf32>
    %311 = arith.addf %310, %6 : vector<1x128xf32>
    %312 = vector.extract_strided_slice %311 {offsets = [0, 0], sizes = [1, 96], strides = [1, 1]} : vector<1x128xf32> to vector<1x96xf32>
    %313 = arith.negf %312 : vector<1x96xf32>
    %314 = math.exp %313 : vector<1x96xf32>
    %cst_49 = arith.constant 1.000000e+00 : f32
    %315 = vector.broadcast %cst_49 : f32 to vector<1x96xf32>
    %316 = arith.addf %315, %314 : vector<1x96xf32>
    %317 = arith.divf %315, %316 : vector<1x96xf32>
    %318 = vector.extract_strided_slice %317 {offsets = [0, 0], sizes = [1, 32], strides = [1, 1]} : vector<1x96xf32> to vector<1x32xf32>
    %319 = vector.extract_strided_slice %317 {offsets = [0, 32], sizes = [1, 32], strides = [1, 1]} : vector<1x96xf32> to vector<1x32xf32>
    %320 = vector.extract_strided_slice %317 {offsets = [0, 64], sizes = [1, 32], strides = [1, 1]} : vector<1x96xf32> to vector<1x32xf32>
    %321 = vector.extract_strided_slice %311 {offsets = [0, 96], sizes = [1, 32], strides = [1, 1]} : vector<1x128xf32> to vector<1x32xf32>
    %322 = math.tanh %321 : vector<1x32xf32>
    %323 = arith.mulf %319, %304 : vector<1x32xf32>
    %324 = arith.mulf %318, %322 : vector<1x32xf32>
    %325 = arith.addf %323, %324 : vector<1x32xf32>
    %326 = math.tanh %325 : vector<1x32xf32>
    %327 = arith.mulf %320, %326 : vector<1x32xf32>
    %cst_50 = arith.constant 0.000000e+00 : f32
    %328 = vector.broadcast %cst_50 : f32 to vector<1x96xf32>
    %329 = tpu.concatenate %327, %328 in 1 : vector<1x32xf32>, vector<1x96xf32> -> vector<1x128xf32>
    %c0_51 = arith.constant 0 : index
    %c0_52 = arith.constant 0 : index
    %330 = vector.load %arg5[%c0_51, %c0_52] : memref<1x128xf32, #tpu.memory_space<vmem>>, vector<1x128xf32>
    tpu.vector_store %arg5[%c0_51, %c0_52], %329 {strides = array<i32>} : memref<1x128xf32, #tpu.memory_space<vmem>>, vector<1x128xf32>,
    return
  }
}

</mosaic_0001>

<llo_original>
// kernel: encoder_forward.1
$region0: #{encoder_forward.1}
  #allocation0 [shape = 'u32[]', space=smem, size = 0x4, offset = 0x4, fixed_abs, tag = 'smem constant byte address 0x4 - core index']
  #allocation1 [shape = 'u32[144,128]{1,0:T(1,128)}', space=vmem, size = 0x12000, scoped, tag = 'internal scratch']
  %s0 = inlined_call_operand.vmem [shape: f32[8,4], index: 0, kind: input, shape index: {}]
  %s1 = inlined_call_operand.vmem [shape: f32[4,512], index: 1, kind: input, shape index: {}]
  %s2 = inlined_call_operand.vmem [shape: f32[1,512], index: 2, kind: input, shape index: {}]
  %s3 = inlined_call_operand.hbm [shape: f32[160,640], index: 3, kind: input, shape index: {}]
  %s4 = inlined_call_operand.vmem [shape: f32[1,128], index: 4, kind: input, shape index: {}]
  %s5 = inlined_call_operand.hbm [shape: f32[1,128], index: 5, kind: output, shape index: {}]
  %s6 = sld [smem:[#allocation0]]
  $region34: #{encoder_forward.1} parent=0
    _
  %s8 = ssub.s32 1, %s6
  %s9 = scalar_select 0, %s8, %s6
  $region1: #{encoder_forward.1} parent=0
    #allocation2 [shape = 'u8[409600]{0}', space=vmem, size = 0x64000, scoped, tag = 'input window, operand 3, single buffered']
    #allocation3 [shape = 's32[1]{0}', space=sflag, size = 0x4, scoped, tag = 'scoped memory for encoder_forward.1']
    #allocation4 [shape = 's32[1]{0}', space=sflag, size = 0x4, scoped, tag = 'scoped memory for encoder_forward.1']
    #allocation5 [shape = 'u8[512]{0}', space=vmem, size = 0x400, scoped, tag = 'output window, operand 0, single buffered']
    %10 = vsyncpa [#allocation3], 0
    %11 = vsyncpa [#allocation4], 0
    // Predicated region
    $region2: #{encoder_forward.1} parent=1 // pred_check
      _
    $region3: #{encoder_forward.1} parent=1 // pred_check_branch
      %13 = sbr.rel (0) target = $region5
    $region4: #{encoder_forward.1} parent=1 // pred_region
      _
    $region5: #{encoder_forward.1} parent=1 // pred_fallthru
      _
    // Predicated region
    $region6: #{encoder_forward.1} parent=1 // pred_check
      _
    $region7: #{encoder_forward.1} parent=1 // pred_check_branch
      %15 = sbr.rel (0) target = $region9
    $region8: #{encoder_forward.1} parent=1 // pred_region
      _
    $region9: #{encoder_forward.1} parent=1 // pred_fallthru
      _
    // Predicated region
    $region10: #{encoder_forward.1} parent=1 // pred_check
      _
    $region11: #{encoder_forward.1} parent=1 // pred_check_branch
      %17 = sbr.rel (0) target = $region13
    $region12: #{encoder_forward.1} parent=1 // pred_region
      _
    $region13: #{encoder_forward.1} parent=1 // pred_fallthru
      _
    // Predicated region
    $region14: #{encoder_forward.1} parent=1 // pred_check
      _
    $region15: #{encoder_forward.1} parent=1 // pred_check_branch
      %19 = sbr.rel (0) target = $region17
    $region16: #{encoder_forward.1} parent=1 // pred_region
      %s21 = ssub.s32 12800, 12800
      %22 = vsyncadd [#allocation3], %s21
      %s23 = sshll.u32 [#allocation2], 4
      %s24 = int_to_ptr.vmem [resolvable:$true] %s23
      %29 = dma.hbm_to_vmem [thread:$0]  %s3, 12800, %s24, [#allocation3], 640, 640, 40
    $region17: #{encoder_forward.1} parent=1 // pred_fallthru
      _
    // Predicated region
    $region18: #{encoder_forward.1} parent=1 // pred_check
      _
    $region19: #{encoder_forward.1} parent=1 // pred_check_branch
      %31 = sbr.rel (0) target = $region21
    $region20: #{encoder_forward.1} parent=1 // pred_region
      _
    $region21: #{encoder_forward.1} parent=1 // pred_fallthru
      _
    // Predicated region
    $region22: #{encoder_forward.1} parent=1 // pred_check
      _
    $region23: #{encoder_forward.1} parent=1 // pred_check_branch
      %33 = sbr.rel (0) target = $region25
    $region24: #{encoder_forward.1} parent=1 // pred_region
      %34 = dma.done [#allocation3], 12800
    $region25: #{encoder_forward.1} parent=1 // pred_fallthru
      _
    %v35 = vld [vmem:[%s0] sm:$0xff]
    %v36 = vld [vmem:[%s1] sm:$0xff]
    %v37 = vld [vmem:[%s1 + $0x8] sm:$0xff]
    %v38 = vld [vmem:[%s2] sm:$0xf]
    %v40 = vlaneseq
    %v41 = vshrl.u32 %v40, 7
    %v42 = vsub.s32 0, %v41
    %v43 = vrot.slane %v38, %v42
    %v44 = vlaneseq
    %v45 = vshrl.u32 %v44, 7
    %v46 = vsub.s32 1, %v45
    %v47 = vrot.slane %v38, %v46
    %v48 = vlaneseq
    %v49 = vshrl.u32 %v48, 7
    %v50 = vsub.s32 2, %v49
    %v51 = vrot.slane %v38, %v50
    %v52 = vlaneseq
    %v53 = vshrl.u32 %v52, 7
    %v54 = vsub.s32 3, %v53
    %v55 = vrot.slane %v38, %v54
    %v62 = vcombine.high %v36, %v36
    %v63 = vcombine.high %v37, %v37
    %vm64 = vcmask 31744
    %v66 = vsel %vm64, %v35, 0
    %vm68 = vcmask 1043456
    %v69 = vsel %vm68, %v36, 0
    %v71 = vsel %vm68, %v62, 0
    %v73 = vsel %vm68, %v37, 0
    %v75 = vsel %vm68, %v63, 0
    %77 = vmatprep.subr.mxu0 %v71
    %78 = vmatpush1.msra.mxu0 %v69
    %79 = vmatprep.subr.mxu0 0.0
    %80 = vmatpush1.msra.mxu0 0.0
    %81 = vmatprep.subr.mxu0 0.0
    %82 = vmatpush1.msra.mxu0 0.0
    %83 = vmatprep.subr.mxu0 0.0
    %84 = vmatpush1.msra.mxu0 0.0
    %85 = vmatprep.subr.mxu0 0.0
    %86 = vmatpush1.msra.mxu0 0.0
    %87 = vmatprep.subr.mxu0 0.0
    %88 = vmatpush1.msra.mxu0 0.0
    %89 = vmatprep.subr.mxu0 0.0
    %90 = vmatpush1.msra.mxu0 0.0
    %91 = vmatprep.subr.mxu0 0.0
    %92 = vmatpush1.msra.mxu0 0.0
    %93 = vmatprep.subr.mxu0 0.0
    %94 = vmatpush1.msra.mxu0 0.0
    %95 = vmatprep.subr.mxu0 0.0
    %96 = vmatpush1.msra.mxu0 0.0
    %97 = vmatprep.subr.mxu0 0.0
    %98 = vmatpush1.msra.mxu0 0.0
    %99 = vmatprep.subr.mxu0 0.0
    %100 = vmatpush1.msra.mxu0 0.0
    %101 = vmatprep.subr.mxu0 0.0
    %102 = vmatpush1.msra.mxu0 0.0
    %103 = vmatprep.subr.mxu0 0.0
    %104 = vmatpush1.msra.mxu0 0.0
    %105 = vmatprep.subr.mxu0 0.0
    %106 = vmatpush1.msra.mxu0 0.0
    %107 = vmatprep.subr.mxu0 0.0
    %108 = vmatpush1.msra.mxu0 0.0
    %109 = vmatprep.subr.mxu0 0.0
    %110 = vmatpush1.msra.mxu0 0.0
    %111 = vmatprep.subr.mxu0 0.0
    %112 = vmatpush1.msra.mxu0 0.0
    %113 = vmatprep.subr.mxu0 0.0
    %114 = vmatpush1.msra.mxu0 0.0
    %115 = vmatprep.subr.mxu0 0.0
    %116 = vmatpush1.msra.mxu0 0.0
    %117 = vmatprep.subr.mxu0 0.0
    %118 = vmatpush1.msra.mxu0 0.0
    %119 = vmatprep.subr.mxu0 0.0
    %120 = vmatpush1.msra.mxu0 0.0
    %121 = vmatprep.subr.mxu0 0.0
    %122 = vmatpush1.msra.mxu0 0.0
    %123 = vmatprep.subr.mxu0 0.0
    %124 = vmatpush1.msra.mxu0 0.0
    %125 = vmatprep.subr.mxu0 0.0
    %126 = vmatpush1.msra.mxu0 0.0
    %127 = vmatprep.subr.mxu0 0.0
    %128 = vmatpush1.msra.mxu0 0.0
    %129 = vmatprep.subr.mxu0 0.0
    %130 = vmatpush1.msra.mxu0 0.0
    %131 = vmatprep.subr.mxu0 0.0
    %132 = vmatpush1.msra.mxu0 0.0
    %133 = vmatprep.subr.mxu0 0.0
    %134 = vmatpush1.msra.mxu0 0.0
    %135 = vmatprep.subr.mxu0 0.0
    %136 = vmatpush1.msra.mxu0 0.0
    %137 = vmatprep.subr.mxu0 0.0
    %138 = vmatpush1.msra.mxu0 0.0
    %139 = vmatprep.subr.mxu0 0.0
    %140 = vmatpush1.msra.mxu0 0.0
    %141 = vmatprep.mubr.f32.mxu0 0.0
    %142 = vmatmul.mubr.f32.gmra.mrb[0].mxu0 %v66
    %v143 = vpop.f32.mrb[0].mxu0
    %v144 = vadd.f32 %v43, %v143
    %v145 = vpop.f32.mrb[0].mxu0
    %v146 = vadd.f32 %v47, %v145
    %147 = vdwg.mxu0
    %148 = vmatprep.subr.mxu0 %v75
    %149 = vmatpush1.msra.mxu0 %v73
    %150 = vmatprep.subr.mxu0 0.0
    %151 = vmatpush1.msra.mxu0 0.0
    %152 = vmatprep.subr.mxu0 0.0
    %153 = vmatpush1.msra.mxu0 0.0
    %154 = vmatprep.subr.mxu0 0.0
    %155 = vmatpush1.msra.mxu0 0.0
    %156 = vmatprep.subr.mxu0 0.0
    %157 = vmatpush1.msra.mxu0 0.0
    %158 = vmatprep.subr.mxu0 0.0
    %159 = vmatpush1.msra.mxu0 0.0
    %160 = vmatprep.subr.mxu0 0.0
    %161 = vmatpush1.msra.mxu0 0.0
    %162 = vmatprep.subr.mxu0 0.0
    %163 = vmatpush1.msra.mxu0 0.0
    %164 = vmatprep.subr.mxu0 0.0
    %165 = vmatpush1.msra.mxu0 0.0
    %166 = vmatprep.subr.mxu0 0.0
    %167 = vmatpush1.msra.mxu0 0.0
    %168 = vmatprep.subr.mxu0 0.0
    %169 = vmatpush1.msra.mxu0 0.0
    %170 = vmatprep.subr.mxu0 0.0
    %171 = vmatpush1.msra.mxu0 0.0
    %172 = vmatprep.subr.mxu0 0.0
    %173 = vmatpush1.msra.mxu0 0.0
    %174 = vmatprep.subr.mxu0 0.0
    %175 = vmatpush1.msra.mxu0 0.0
    %176 = vmatprep.subr.mxu0 0.0
    %177 = vmatpush1.msra.mxu0 0.0
    %178 = vmatprep.subr.mxu0 0.0
    %179 = vmatpush1.msra.mxu0 0.0
    %180 = vmatprep.subr.mxu0 0.0
    %181 = vmatpush1.msra.mxu0 0.0
    %182 = vmatprep.subr.mxu0 0.0
    %183 = vmatpush1.msra.mxu0 0.0
    %184 = vmatprep.subr.mxu0 0.0
    %185 = vmatpush1.msra.mxu0 0.0
    %186 = vmatprep.subr.mxu0 0.0
    %187 = vmatpush1.msra.mxu0 0.0
    %188 = vmatprep.subr.mxu0 0.0
    %189 = vmatpush1.msra.mxu0 0.0
    %190 = vmatprep.subr.mxu0 0.0
    %191 = vmatpush1.msra.mxu0 0.0
    %192 = vmatprep.subr.mxu0 0.0
    %193 = vmatpush1.msra.mxu0 0.0
    %194 = vmatprep.subr.mxu0 0.0
    %195 = vmatpush1.msra.mxu0 0.0
    %196 = vmatprep.subr.mxu0 0.0
    %197 = vmatpush1.msra.mxu0 0.0
    %198 = vmatprep.subr.mxu0 0.0
    %199 = vmatpush1.msra.mxu0 0.0
    %200 = vmatprep.subr.mxu0 0.0
    %201 = vmatpush1.msra.mxu0 0.0
    %202 = vmatprep.subr.mxu0 0.0
    %203 = vmatpush1.msra.mxu0 0.0
    %204 = vmatprep.subr.mxu0 0.0
    %205 = vmatpush1.msra.mxu0 0.0
    %206 = vmatprep.subr.mxu0 0.0
    %207 = vmatpush1.msra.mxu0 0.0
    %208 = vmatprep.subr.mxu0 0.0
    %209 = vmatpush1.msra.mxu0 0.0
    %210 = vmatprep.subr.mxu0 0.0
    %211 = vmatpush1.msra.mxu0 0.0
    %212 = vmatprep.mubr.f32.mxu0 0.0
    %213 = vmatmul.mubr.f32.gmra.mrb[0].mxu0 %v66
    %v214 = vpop.f32.mrb[0].mxu0
    %v215 = vadd.f32 %v51, %v214
    %v216 = vpop.f32.mrb[0].mxu0
    %v217 = vadd.f32 %v55, %v216
    %218 = vdwg.mxu0
    %v219 = vld [vmem:[%s4] sm:$0x1]
    %v220 = vxor.u32 %v144, 2147483648
    %v221 = vxor.u32 %v146, 2147483648
    %v222 = vxor.u32 %v215, 2147483648
    %v223 = vmul.f32 %v220, 1.442695
    %v224 = vpow.pop %v223
    %v225 = vmul.f32 %v221, 1.442695
    %v226 = vpow.pop %v225
    %v227 = vmul.f32 %v222, 1.442695
    %v228 = vpow.pop %v227
    %v229 = vadd.f32 %v224, 1.0
    %v230 = vadd.f32 %v226, 1.0
    %v231 = vadd.f32 %v228, 1.0
    %v232 = vrcp.pop %v229
    %v233 = vmul.f32 1.0, %v232
    %v234 = vrcp.pop %v230
    %v235 = vmul.f32 1.0, %v234
    %v236 = vrcp.pop %v231
    %v237 = vmul.f32 1.0, %v236
    %v238 = vtanh.pop %v217
    %v239 = vmul.f32 %v235, 0.0
    %v240 = vmul.f32 %v233, %v238
    %v241 = vadd.f32 %v239, %v240
    %v242 = vtanh.pop %v241
    %v243 = vmul.f32 %v237, %v242
    %v244 = vld [vmem:[#allocation2] sm:$0xff]
    %v245 = vld [vmem:[#allocation2 + $0x8] sm:$0xff]
    %v246 = vld [vmem:[#allocation2 + $0x10] sm:$0xff]
    %v247 = vld [vmem:[#allocation2 + $0x18] sm:$0xff]
    %v248 = vld [vmem:[#allocation2 + $0x20] sm:$0xff]
    %v249 = vld [vmem:[#allocation2 + $0x28] sm:$0xff]
    %v250 = vld [vmem:[#allocation2 + $0x30] sm:$0xff]
    %v251 = vld [vmem:[#allocation2 + $0x38] sm:$0xff]
    %v252 = vld [vmem:[#allocation2 + $0x40] sm:$0xff]
    %v253 = vld [vmem:[#allocation2 + $0x48] sm:$0xff]
    %v254 = vld [vmem:[#allocation2 + $0x50] sm:$0xff]
    %v255 = vld [vmem:[#allocation2 + $0x58] sm:$0xff]
    %v256 = vld [vmem:[#allocation2 + $0x60] sm:$0xff]
    %v257 = vld [vmem:[#allocation2 + $0x68] sm:$0xff]
    %v258 = vld [vmem:[#allocation2 + $0x70] sm:$0xff]
    %v259 = vld [vmem:[#allocation2 + $0x78] sm:$0xff]
    %v260 = vld [vmem:[#allocation2 + $0x80] sm:$0xff]
    %v261 = vld [vmem:[#allocation2 + $0x88] sm:$0xff]
    %v262 = vld [vmem:[#allocation2 + $0x90] sm:$0xff]
    %v263 = vld [vmem:[#allocation2 + $0x98] sm:$0xff]
    %v264 = vld [vmem:[#allocation2 + $0xa0] sm:$0xff]
    %v265 = vld [vmem:[#allocation2 + $0xa8] sm:$0xff]
    %v266 = vld [vmem:[#allocation2 + $0xb0] sm:$0xff]
    %v267 = vld [vmem:[#allocation2 + $0xb8] sm:$0xff]
    %v268 = vld [vmem:[#allocation2 + $0xc0] sm:$0xff]
    %v269 = vld [vmem:[#allocation2 + $0xc8] sm:$0xff]
    %v270 = vld [vmem:[#allocation2 + $0xd0] sm:$0xff]
    %v271 = vld [vmem:[#allocation2 + $0xd8] sm:$0xff]
    %v272 = vld [vmem:[#allocation2 + $0xe0] sm:$0xff]
    %v273 = vld [vmem:[#allocation2 + $0xe8] sm:$0xff]
    %v274 = vld [vmem:[#allocation2 + $0xf0] sm:$0xff]
    %v275 = vld [vmem:[#allocation2 + $0xf8] sm:$0xff]
    %v276 = vld [vmem:[#allocation2 + $0x100] sm:$0xff]
    %v277 = vld [vmem:[#allocation2 + $0x108] sm:$0xff]
    %v278 = vld [vmem:[#allocation2 + $0x110] sm:$0xff]
    %v279 = vld [vmem:[#allocation2 + $0x118] sm:$0xff]
    %v280 = vld [vmem:[#allocation2 + $0x120] sm:$0xff]
    %v281 = vld [vmem:[#allocation2 + $0x128] sm:$0xff]
    %v282 = vld [vmem:[#allocation2 + $0x130] sm:$0xff]
    %v283 = vld [vmem:[#allocation2 + $0x138] sm:$0xff]
    %v284 = vld [vmem:[#allocation2 + $0x140] sm:$0xff]
    %v285 = vld [vmem:[#allocation2 + $0x148] sm:$0xff]
    %v286 = vld [vmem:[#allocation2 + $0x150] sm:$0xff]
    %v287 = vld [vmem:[#allocation2 + $0x158] sm:$0xff]
    %v288 = vld [vmem:[#allocation2 + $0x160] sm:$0xff]
    %v289 = vld [vmem:[#allocation2 + $0x168] sm:$0xff]
    %v290 = vld [vmem:[#allocation2 + $0x170] sm:$0xff]
    %v291 = vld [vmem:[#allocation2 + $0x178] sm:$0xff]
    %v292 = vld [vmem:[#allocation2 + $0x180] sm:$0xff]
    %v293 = vld [vmem:[#allocation2 + $0x188] sm:$0xff]
    %v294 = vld [vmem:[#allocation2 + $0x190] sm:$0xff]
    %v295 = vld [vmem:[#allocation2 + $0x198] sm:$0xff]
    %v296 = vld [vmem:[#allocation2 + $0x1a0] sm:$0xff]
    %v297 = vld [vmem:[#allocation2 + $0x1a8] sm:$0xff]
    %v298 = vld [vmem:[#allocation2 + $0x1b0] sm:$0xff]
    %v299 = vld [vmem:[#allocation2 + $0x1b8] sm:$0xff]
    %v300 = vld [vmem:[#allocation2 + $0x1c0] sm:$0xff]
    %v301 = vld [vmem:[#allocation2 + $0x1c8] sm:$0xff]
    %v302 = vld [vmem:[#allocation2 + $0x1d0] sm:$0xff]
    %v303 = vld [vmem:[#allocation2 + $0x1d8] sm:$0xff]
    %v304 = vld [vmem:[#allocation2 + $0x1e0] sm:$0xff]
    %v305 = vld [vmem:[#allocation2 + $0x1e8] sm:$0xff]
    %v306 = vld [vmem:[#allocation2 + $0x1f0] sm:$0xff]
    %v307 = vld [vmem:[#allocation2 + $0x1f8] sm:$0xff]
    %v308 = vld [vmem:[#allocation2 + $0x200] sm:$0xff]
    %v309 = vld [vmem:[#allocation2 + $0x208] sm:$0xff]
    %v310 = vld [vmem:[#allocation2 + $0x210] sm:$0xff]
    %v311 = vld [vmem:[#allocation2 + $0x218] sm:$0xff]
    %v312 = vld [vmem:[#allocation2 + $0x220] sm:$0xff]
    %v313 = vld [vmem:[#allocation2 + $0x228] sm:$0xff]
    %v314 = vld [vmem:[#allocation2 + $0x230] sm:$0xff]
    %v315 = vld [vmem:[#allocation2 + $0x238] sm:$0xff]
    %v316 = vld [vmem:[#allocation2 + $0x240] sm:$0xff]
    %v317 = vld [vmem:[#allocation2 + $0x248] sm:$0xff]
    %v318 = vld [vmem:[#allocation2 + $0x250] sm:$0xff]
    %v319 = vld [vmem:[#allocation2 + $0x258] sm:$0xff]
    %v320 = vld [vmem:[#allocation2 + $0x260] sm:$0xff]
    %v321 = vld [vmem:[#allocation2 + $0x268] sm:$0xff]
    %v322 = vld [vmem:[#allocation2 + $0x270] sm:$0xff]
    %v323 = vld [vmem:[#allocation2 + $0x278] sm:$0xff]
    %v324 = vld [vmem:[#allocation2 + $0x280] sm:$0xff]
    %v325 = vld [vmem:[#allocation2 + $0x288] sm:$0xff]
    %v326 = vld [vmem:[#allocation2 + $0x290] sm:$0xff]
    %v327 = vld [vmem:[#allocation2 + $0x298] sm:$0xff]
    %v328 = vld [vmem:[#allocation2 + $0x2a0] sm:$0xff]
    %v329 = vld [vmem:[#allocation2 + $0x2a8] sm:$0xff]
    %v330 = vld [vmem:[#allocation2 + $0x2b0] sm:$0xff]
    %v331 = vld [vmem:[#allocation2 + $0x2b8] sm:$0xff]
    %v332 = vld [vmem:[#allocation2 + $0x2c0] sm:$0xff]
    %v333 = vld [vmem:[#allocation2 + $0x2c8] sm:$0xff]
    %v334 = vld [vmem:[#allocation2 + $0x2d0] sm:$0xff]
    %v335 = vld [vmem:[#allocation2 + $0x2d8] sm:$0xff]
    %v336 = vld [vmem:[#allocation2 + $0x2e0] sm:$0xff]
    %v337 = vld [vmem:[#allocation2 + $0x2e8] sm:$0xff]
    %v338 = vld [vmem:[#allocation2 + $0x2f0] sm:$0xff]
    %v339 = vld [vmem:[#allocation2 + $0x2f8] sm:$0xff]
    %v340 = vld [vmem:[#allocation2 + $0x300] sm:$0xff]
    %v341 = vld [vmem:[#allocation2 + $0x308] sm:$0xff]
    %v342 = vld [vmem:[#allocation2 + $0x310] sm:$0xff]
    %v343 = vld [vmem:[#allocation2 + $0x318] sm:$0xff]
    %vm344 = vcmask 261120
    %v346 = vsel %vm344, 0.0, 0
    %348 = vmatprep.subr.mxu0 %v245
    %349 = vmatpush1.msra.mxu0 %v244
    %350 = vmatprep.subr.mxu0 %v250
    %351 = vmatpush1.msra.mxu0 %v249
    %352 = vmatprep.subr.mxu0 %v255
    %353 = vmatpush1.msra.mxu0 %v254
    %354 = vmatprep.subr.mxu0 %v260
    %355 = vmatpush1.msra.mxu0 %v259
    %356 = vmatprep.subr.mxu0 %v265
    %357 = vmatpush1.msra.mxu0 %v264
    %358 = vmatprep.subr.mxu0 %v270
    %359 = vmatpush1.msra.mxu0 %v269
    %360 = vmatprep.subr.mxu0 %v275
    %361 = vmatpush1.msra.mxu0 %v274
    %362 = vmatprep.subr.mxu0 %v280
    %363 = vmatpush1.msra.mxu0 %v279
    %364 = vmatprep.subr.mxu0 %v285
    %365 = vmatpush1.msra.mxu0 %v284
    %366 = vmatprep.subr.mxu0 %v290
    %367 = vmatpush1.msra.mxu0 %v289
    %368 = vmatprep.subr.mxu0 %v295
    %369 = vmatpush1.msra.mxu0 %v294
    %370 = vmatprep.subr.mxu0 %v300
    %371 = vmatpush1.msra.mxu0 %v299
    %372 = vmatprep.subr.mxu0 %v305
    %373 = vmatpush1.msra.mxu0 %v304
    %374 = vmatprep.subr.mxu0 %v310
    %375 = vmatpush1.msra.mxu0 %v309
    %376 = vmatprep.subr.mxu0 %v315
    %377 = vmatpush1.msra.mxu0 %v314
    %378 = vmatprep.subr.mxu0 %v320
    %379 = vmatpush1.msra.mxu0 %v319
    %380 = vmatprep.subr.mxu0 %v325
    %381 = vmatpush1.msra.mxu0 %v324
    %382 = vmatprep.subr.mxu0 %v330
    %383 = vmatpush1.msra.mxu0 %v329
    %384 = vmatprep.subr.mxu0 %v335
    %385 = vmatpush1.msra.mxu0 %v334
    %386 = vmatprep.subr.mxu0 %v340
    %387 = vmatpush1.msra.mxu0 %v339
    %388 = vmatprep.subr.mxu0 0.0
    %389 = vmatpush1.msra.mxu0 0.0
    %390 = vmatprep.subr.mxu0 0.0
    %391 = vmatpush1.msra.mxu0 0.0
    %392 = vmatprep.subr.mxu0 0.0
    %393 = vmatpush1.msra.mxu0 0.0
    %394 = vmatprep.subr.mxu0 0.0
    %395 = vmatpush1.msra.mxu0 0.0
    %396 = vmatprep.subr.mxu0 0.0
    %397 = vmatpush1.msra.mxu0 0.0
    %398 = vmatprep.subr.mxu0 0.0
    %399 = vmatpush1.msra.mxu0 0.0
    %400 = vmatprep.subr.mxu0 0.0
    %401 = vmatpush1.msra.mxu0 0.0
    %402 = vmatprep.subr.mxu0 0.0
    %403 = vmatpush1.msra.mxu0 0.0
    %404 = vmatprep.subr.mxu0 0.0
    %405 = vmatpush1.msra.mxu0 0.0
    %406 = vmatprep.subr.mxu0 0.0
    %407 = vmatpush1.msra.mxu0 0.0
    %408 = vmatprep.subr.mxu0 0.0
    %409 = vmatpush1.msra.mxu0 0.0
    %410 = vmatprep.subr.mxu0 0.0
    %411 = vmatpush1.msra.mxu0 0.0
    %412 = vmatprep.mubr.f32.mxu0 %v346
    %413 = vmatmul.mubr.f32.gmra.mrb[0].mxu0 %v243
    %v414 = vpop.f32.mrb[0].mxu0
    %v415 = vadd.f32 0.0, %v414
    %v416 = vpop.f32.mrb[0].mxu0
    %v417 = vadd.f32 0.0, %v416
    %418 = vdwg.mxu0
    %419 = vmatprep.subr.mxu0 %v247
    %420 = vmatpush1.msra.mxu0 %v246
    %421 = vmatprep.subr.mxu0 %v252
    %422 = vmatpush1.msra.mxu0 %v251
    %423 = vmatprep.subr.mxu0 %v257
    %424 = vmatpush1.msra.mxu0 %v256
    %425 = vmatprep.subr.mxu0 %v262
    %426 = vmatpush1.msra.mxu0 %v261
    %427 = vmatprep.subr.mxu0 %v267
    %428 = vmatpush1.msra.mxu0 %v266
    %429 = vmatprep.subr.mxu0 %v272
    %430 = vmatpush1.msra.mxu0 %v271
    %431 = vmatprep.subr.mxu0 %v277
    %432 = vmatpush1.msra.mxu0 %v276
    %433 = vmatprep.subr.mxu0 %v282
    %434 = vmatpush1.msra.mxu0 %v281
    %435 = vmatprep.subr.mxu0 %v287
    %436 = vmatpush1.msra.mxu0 %v286
    %437 = vmatprep.subr.mxu0 %v292
    %438 = vmatpush1.msra.mxu0 %v291
    %439 = vmatprep.subr.mxu0 %v297
    %440 = vmatpush1.msra.mxu0 %v296
    %441 = vmatprep.subr.mxu0 %v302
    %442 = vmatpush1.msra.mxu0 %v301
    %443 = vmatprep.subr.mxu0 %v307
    %444 = vmatpush1.msra.mxu0 %v306
    %445 = vmatprep.subr.mxu0 %v312
    %446 = vmatpush1.msra.mxu0 %v311
    %447 = vmatprep.subr.mxu0 %v317
    %448 = vmatpush1.msra.mxu0 %v316
    %449 = vmatprep.subr.mxu0 %v322
    %450 = vmatpush1.msra.mxu0 %v321
    %451 = vmatprep.subr.mxu0 %v327
    %452 = vmatpush1.msra.mxu0 %v326
    %453 = vmatprep.subr.mxu0 %v332
    %454 = vmatpush1.msra.mxu0 %v331
    %455 = vmatprep.subr.mxu0 %v337
    %456 = vmatpush1.msra.mxu0 %v336
    %457 = vmatprep.subr.mxu0 %v342
    %458 = vmatpush1.msra.mxu0 %v341
    %459 = vmatprep.subr.mxu0 0.0
    %460 = vmatpush1.msra.mxu0 0.0
    %461 = vmatprep.subr.mxu0 0.0
    %462 = vmatpush1.msra.mxu0 0.0
    %463 = vmatprep.subr.mxu0 0.0
    %464 = vmatpush1.msra.mxu0 0.0
    %465 = vmatprep.subr.mxu0 0.0
    %466 = vmatpush1.msra.mxu0 0.0
    %467 = vmatprep.subr.mxu0 0.0
    %468 = vmatpush1.msra.mxu0 0.0
    %469 = vmatprep.subr.mxu0 0.0
    %470 = vmatpush1.msra.mxu0 0.0
    %471 = vmatprep.subr.mxu0 0.0
    %472 = vmatpush1.msra.mxu0 0.0
    %473 = vmatprep.subr.mxu0 0.0
    %474 = vmatpush1.msra.mxu0 0.0
    %475 = vmatprep.subr.mxu0 0.0
    %476 = vmatpush1.msra.mxu0 0.0
    %477 = vmatprep.subr.mxu0 0.0
    %478 = vmatpush1.msra.mxu0 0.0
    %479 = vmatprep.subr.mxu0 0.0
    %480 = vmatpush1.msra.mxu0 0.0
    %481 = vmatprep.subr.mxu0 0.0
    %482 = vmatpush1.msra.mxu0 0.0
    %483 = vmatprep.mubr.f32.mxu0 %v346
    %484 = vmatmul.mubr.f32.gmra.mrb[0].mxu0 %v243
    %v485 = vpop.f32.mrb[0].mxu0
    %v486 = vadd.f32 0.0, %v485
    %v487 = vpop.f32.mrb[0].mxu0
    %v488 = vadd.f32 0.0, %v487
    %489 = vdwg.mxu0
    %490 = vmatprep.subr.mxu0 0.0
    %491 = vmatpush1.msra.mxu0 %v248
    %492 = vmatprep.subr.mxu0 0.0
    %493 = vmatpush1.msra.mxu0 %v253
    %494 = vmatprep.subr.mxu0 0.0
    %495 = vmatpush1.msra.mxu0 %v258
    %496 = vmatprep.subr.mxu0 0.0
    %497 = vmatpush1.msra.mxu0 %v263
    %498 = vmatprep.subr.mxu0 0.0
    %499 = vmatpush1.msra.mxu0 %v268
    %500 = vmatprep.subr.mxu0 0.0
    %501 = vmatpush1.msra.mxu0 %v273
    %502 = vmatprep.subr.mxu0 0.0
    %503 = vmatpush1.msra.mxu0 %v278
    %504 = vmatprep.subr.mxu0 0.0
    %505 = vmatpush1.msra.mxu0 %v283
    %506 = vmatprep.subr.mxu0 0.0
    %507 = vmatpush1.msra.mxu0 %v288
    %508 = vmatprep.subr.mxu0 0.0
    %509 = vmatpush1.msra.mxu0 %v293
    %510 = vmatprep.subr.mxu0 0.0
    %511 = vmatpush1.msra.mxu0 %v298
    %512 = vmatprep.subr.mxu0 0.0
    %513 = vmatpush1.msra.mxu0 %v303
    %514 = vmatprep.subr.mxu0 0.0
    %515 = vmatpush1.msra.mxu0 %v308
    %516 = vmatprep.subr.mxu0 0.0
    %517 = vmatpush1.msra.mxu0 %v313
    %518 = vmatprep.subr.mxu0 0.0
    %519 = vmatpush1.msra.mxu0 %v318
    %520 = vmatprep.subr.mxu0 0.0
    %521 = vmatpush1.msra.mxu0 %v323
    %522 = vmatprep.subr.mxu0 0.0
    %523 = vmatpush1.msra.mxu0 %v328
    %524 = vmatprep.subr.mxu0 0.0
    %525 = vmatpush1.msra.mxu0 %v333
    %526 = vmatprep.subr.mxu0 0.0
    %527 = vmatpush1.msra.mxu0 %v338
    %528 = vmatprep.subr.mxu0 0.0
    %529 = vmatpush1.msra.mxu0 %v343
    %530 = vmatprep.subr.mxu0 0.0
    %531 = vmatpush1.msra.mxu0 0.0
    %532 = vmatprep.subr.mxu0 0.0
    %533 = vmatpush1.msra.mxu0 0.0
    %534 = vmatprep.subr.mxu0 0.0
    %535 = vmatpush1.msra.mxu0 0.0
    %536 = vmatprep.subr.mxu0 0.0
    %537 = vmatpush1.msra.mxu0 0.0
    %538 = vmatprep.subr.mxu0 0.0
    %539 = vmatpush1.msra.mxu0 0.0
    %540 = vmatprep.subr.mxu0 0.0
    %541 = vmatpush1.msra.mxu0 0.0
    %542 = vmatprep.subr.mxu0 0.0
    %543 = vmatpush1.msra.mxu0 0.0
    %544 = vmatprep.subr.mxu0 0.0
    %545 = vmatpush1.msra.mxu0 0.0
    %546 = vmatprep.subr.mxu0 0.0
    %547 = vmatpush1.msra.mxu0 0.0
    %548 = vmatprep.subr.mxu0 0.0
    %549 = vmatpush1.msra.mxu0 0.0
    %550 = vmatprep.subr.mxu0 0.0
    %551 = vmatpush1.msra.mxu0 0.0
    %552 = vmatprep.subr.mxu0 0.0
    %553 = vmatpush1.msra.mxu0 0.0
    %554 = vmatprep.mubr.f32.mxu0 %v346
    %555 = vmatmul.mubr.f32.gmra.mrb[0].mxu0 %v243
    %v556 = vpop.f32.mrb[0].mxu0
    %v557 = vadd.f32 0.0, %v556
    %v558 = vpop.f32.mrb[0].mxu0
    %559 = vdwg.mxu0
    %v564 = vrot.slane %v415, 7
    %v565 = vrot.slane %v417, 7
    %v566 = vrot.slane %v486, 7
    %v567 = vrot.slane %v488, 7
    %v572 = vadd.f32 %v144, %v564
    %v573 = vadd.f32 %v146, %v565
    %v574 = vadd.f32 %v215, %v566
    %v575 = vadd.f32 %v217, %v567
    %v576 = vadd.f32 %v557, %v219
    %v577 = vxor.u32 %v572, 2147483648
    %v578 = vxor.u32 %v573, 2147483648
    %v579 = vxor.u32 %v574, 2147483648
    %v580 = vmul.f32 %v577, 1.442695
    %v581 = vpow.pop %v580
    %v582 = vmul.f32 %v578, 1.442695
    %v583 = vpow.pop %v582
    %v584 = vmul.f32 %v579, 1.442695
    %v585 = vpow.pop %v584
    %v586 = vadd.f32 %v581, 1.0
    %v587 = vadd.f32 %v583, 1.0
    %v588 = vadd.f32 %v585, 1.0
    %v589 = vrcp.pop %v586
    %v590 = vmul.f32 1.0, %v589
    %v591 = vrcp.pop %v587
    %v592 = vmul.f32 1.0, %v591
    %v593 = vrcp.pop %v588
    %v594 = vmul.f32 1.0, %v593
    %v595 = vtanh.pop %v575
    %v597 = vrot.slane %v241, 7
    %v599 = vmul.f32 %v592, %v597
    %v600 = vmul.f32 %v590, %v595
    %v601 = vadd.f32 %v599, %v600
    %v602 = vtanh.pop %v601
    %v603 = vmul.f32 %v594, %v602
    %v604 = vxor.u32 %v576, 2147483648
    %v605 = vmul.f32 %v604, 1.442695
    %v606 = vpow.pop %v605
    %v607 = vadd.f32 %v606, 1.0
    %v608 = vrcp.pop %v607
    %v609 = vmul.f32 1.0, %v608
    %v610 = vtanh.pop %v576
    %v611 = vmul.f32 %v609, 0.0
    %613 = vrot.lane.b32.xlu0 %v610, 32
    %v614 = vpop.permute.xlu0 %613
    %v616 = vmul.f32 %v609, %v614
    %618 = vrot.lane.b32.xlu0 %v616, 32
    %v619 = vpop.permute.xlu0 %618
    %v621 = vadd.f32 %v611, %v619
    %v622 = vtanh.pop %v621
    %624 = vrot.lane.b32.xlu0 %v622, 32
    %v625 = vpop.permute.xlu0 %624
    %v627 = vmul.f32 %v609, %v625
    %v629 = vrot.slane %v627, 7
    %630 = vrot.lane.b32.xlu0 %v629, 64
    %v631 = vpop.permute.xlu0 %630
    %v633 = vrot.slane %v603, 1
    %v634 = vrot.slane %v631, 1
    %v636 = vsel %vm344, %v634, 0
    %638 = vmatprep.subr.mxu0 %v245
    %639 = vmatpush1.msra.mxu0 %v244
    %640 = vmatprep.subr.mxu0 %v250
    %641 = vmatpush1.msra.mxu0 %v249
    %642 = vmatprep.subr.mxu0 %v255
    %643 = vmatpush1.msra.mxu0 %v254
    %644 = vmatprep.subr.mxu0 %v260
    %645 = vmatpush1.msra.mxu0 %v259
    %646 = vmatprep.subr.mxu0 %v265
    %647 = vmatpush1.msra.mxu0 %v264
    %648 = vmatprep.subr.mxu0 %v270
    %649 = vmatpush1.msra.mxu0 %v269
    %650 = vmatprep.subr.mxu0 %v275
    %651 = vmatpush1.msra.mxu0 %v274
    %652 = vmatprep.subr.mxu0 %v280
    %653 = vmatpush1.msra.mxu0 %v279
    %654 = vmatprep.subr.mxu0 %v285
    %655 = vmatpush1.msra.mxu0 %v284
    %656 = vmatprep.subr.mxu0 %v290
    %657 = vmatpush1.msra.mxu0 %v289
    %658 = vmatprep.subr.mxu0 %v295
    %659 = vmatpush1.msra.mxu0 %v294
    %660 = vmatprep.subr.mxu0 %v300
    %661 = vmatpush1.msra.mxu0 %v299
    %662 = vmatprep.subr.mxu0 %v305
    %663 = vmatpush1.msra.mxu0 %v304
    %664 = vmatprep.subr.mxu0 %v310
    %665 = vmatpush1.msra.mxu0 %v309
    %666 = vmatprep.subr.mxu0 %v315
    %667 = vmatpush1.msra.mxu0 %v314
    %668 = vmatprep.subr.mxu0 %v320
    %669 = vmatpush1.msra.mxu0 %v319
    %670 = vmatprep.subr.mxu0 %v325
    %671 = vmatpush1.msra.mxu0 %v324
    %672 = vmatprep.subr.mxu0 %v330
    %673 = vmatpush1.msra.mxu0 %v329
    %674 = vmatprep.subr.mxu0 %v335
    %675 = vmatpush1.msra.mxu0 %v334
    %676 = vmatprep.subr.mxu0 %v340
    %677 = vmatpush1.msra.mxu0 %v339
    %678 = vmatprep.subr.mxu0 0.0
    %679 = vmatpush1.msra.mxu0 0.0
    %680 = vmatprep.subr.mxu0 0.0
    %681 = vmatpush1.msra.mxu0 0.0
    %682 = vmatprep.subr.mxu0 0.0
    %683 = vmatpush1.msra.mxu0 0.0
    %684 = vmatprep.subr.mxu0 0.0
    %685 = vmatpush1.msra.mxu0 0.0
    %686 = vmatprep.subr.mxu0 0.0
    %687 = vmatpush1.msra.mxu0 0.0
    %688 = vmatprep.subr.mxu0 0.0
    %689 = vmatpush1.msra.mxu0 0.0
    %690 = vmatprep.subr.mxu0 0.0
    %691 = vmatpush1.msra.mxu0 0.0
    %692 = vmatprep.subr.mxu0 0.0
    %693 = vmatpush1.msra.mxu0 0.0
    %694 = vmatprep.subr.mxu0 0.0
    %695 = vmatpush1.msra.mxu0 0.0
    %696 = vmatprep.subr.mxu0 0.0
    %697 = vmatpush1.msra.mxu0 0.0
    %698 = vmatprep.subr.mxu0 0.0
    %699 = vmatpush1.msra.mxu0 0.0
    %700 = vmatprep.subr.mxu0 0.0
    %701 = vmatpush1.msra.mxu0 0.0
    %702 = vmatprep.mubr.f32.mxu0 %v636
    %703 = vmatmul.mubr.f32.gmra.mrb[0].mxu0 %v633
    %v704 = vpop.f32.mrb[0].mxu0
    %v705 = vadd.f32 0.0, %v704
    %v706 = vpop.f32.mrb[0].mxu0
    %v707 = vadd.f32 0.0, %v706
    %708 = vdwg.mxu0
    %709 = vmatprep.subr.mxu0 %v247
    %710 = vmatpush1.msra.mxu0 %v246
    %711 = vmatprep.subr.mxu0 %v252
    %712 = vmatpush1.msra.mxu0 %v251
    %713 = vmatprep.subr.mxu0 %v257
    %714 = vmatpush1.msra.mxu0 %v256
    %715 = vmatprep.subr.mxu0 %v262
    %716 = vmatpush1.msra.mxu0 %v261
    %717 = vmatprep.subr.mxu0 %v267
    %718 = vmatpush1.msra.mxu0 %v266
    %719 = vmatprep.subr.mxu0 %v272
    %720 = vmatpush1.msra.mxu0 %v271
    %721 = vmatprep.subr.mxu0 %v277
    %722 = vmatpush1.msra.mxu0 %v276
    %723 = vmatprep.subr.mxu0 %v282
    %724 = vmatpush1.msra.mxu0 %v281
    %725 = vmatprep.subr.mxu0 %v287
    %726 = vmatpush1.msra.mxu0 %v286
    %727 = vmatprep.subr.mxu0 %v292
    %728 = vmatpush1.msra.mxu0 %v291
    %729 = vmatprep.subr.mxu0 %v297
    %730 = vmatpush1.msra.mxu0 %v296
    %731 = vmatprep.subr.mxu0 %v302
    %732 = vmatpush1.msra.mxu0 %v301
    %733 = vmatprep.subr.mxu0 %v307
    %734 = vmatpush1.msra.mxu0 %v306
    %735 = vmatprep.subr.mxu0 %v312
    %736 = vmatpush1.msra.mxu0 %v311
    %737 = vmatprep.subr.mxu0 %v317
    %738 = vmatpush1.msra.mxu0 %v316
    %739 = vmatprep.subr.mxu0 %v322
    %740 = vmatpush1.msra.mxu0 %v321
    %741 = vmatprep.subr.mxu0 %v327
    %742 = vmatpush1.msra.mxu0 %v326
    %743 = vmatprep.subr.mxu0 %v332
    %744 = vmatpush1.msra.mxu0 %v331
    %745 = vmatprep.subr.mxu0 %v337
    %746 = vmatpush1.msra.mxu0 %v336
    %747 = vmatprep.subr.mxu0 %v342
    %748 = vmatpush1.msra.mxu0 %v341
    %749 = vmatprep.subr.mxu0 0.0
    %750 = vmatpush1.msra.mxu0 0.0
    %751 = vmatprep.subr.mxu0 0.0
    %752 = vmatpush1.msra.mxu0 0.0
    %753 = vmatprep.subr.mxu0 0.0
    %754 = vmatpush1.msra.mxu0 0.0
    %755 = vmatprep.subr.mxu0 0.0
    %756 = vmatpush1.msra.mxu0 0.0
    %757 = vmatprep.subr.mxu0 0.0
    %758 = vmatpush1.msra.mxu0 0.0
    %759 = vmatprep.subr.mxu0 0.0
    %760 = vmatpush1.msra.mxu0 0.0
    %761 = vmatprep.subr.mxu0 0.0
    %762 = vmatpush1.msra.mxu0 0.0
    %763 = vmatprep.subr.mxu0 0.0
    %764 = vmatpush1.msra.mxu0 0.0
    %765 = vmatprep.subr.mxu0 0.0
    %766 = vmatpush1.msra.mxu0 0.0
    %767 = vmatprep.subr.mxu0 0.0
    %768 = vmatpush1.msra.mxu0 0.0
    %769 = vmatprep.subr.mxu0 0.0
    %770 = vmatpush1.msra.mxu0 0.0
    %771 = vmatprep.subr.mxu0 0.0
    %772 = vmatpush1.msra.mxu0 0.0
    %773 = vmatprep.mubr.f32.mxu0 %v636
    %774 = vmatmul.mubr.f32.gmra.mrb[0].mxu0 %v633
    %v775 = vpop.f32.mrb[0].mxu0
    %v776 = vadd.f32 0.0, %v775
    %v777 = vpop.f32.mrb[0].mxu0
    %v778 = vadd.f32 0.0, %v777
    %779 = vdwg.mxu0
    %780 = vmatprep.subr.mxu0 0.0
    %781 = vmatpush1.msra.mxu0 %v248
    %782 = vmatprep.subr.mxu0 0.0
    %783 = vmatpush1.msra.mxu0 %v253
    %784 = vmatprep.subr.mxu0 0.0
    %785 = vmatpush1.msra.mxu0 %v258
    %786 = vmatprep.subr.mxu0 0.0
    %787 = vmatpush1.msra.mxu0 %v263
    %788 = vmatprep.subr.mxu0 0.0
    %789 = vmatpush1.msra.mxu0 %v268
    %790 = vmatprep.subr.mxu0 0.0
    %791 = vmatpush1.msra.mxu0 %v273
    %792 = vmatprep.subr.mxu0 0.0
    %793 = vmatpush1.msra.mxu0 %v278
    %794 = vmatprep.subr.mxu0 0.0
    %795 = vmatpush1.msra.mxu0 %v283
    %796 = vmatprep.subr.mxu0 0.0
    %797 = vmatpush1.msra.mxu0 %v288
    %798 = vmatprep.subr.mxu0 0.0
    %799 = vmatpush1.msra.mxu0 %v293
    %800 = vmatprep.subr.mxu0 0.0
    %801 = vmatpush1.msra.mxu0 %v298
    %802 = vmatprep.subr.mxu0 0.0
    %803 = vmatpush1.msra.mxu0 %v303
    %804 = vmatprep.subr.mxu0 0.0
    %805 = vmatpush1.msra.mxu0 %v308
    %806 = vmatprep.subr.mxu0 0.0
    %807 = vmatpush1.msra.mxu0 %v313
    %808 = vmatprep.subr.mxu0 0.0
    %809 = vmatpush1.msra.mxu0 %v318
    %810 = vmatprep.subr.mxu0 0.0
    %811 = vmatpush1.msra.mxu0 %v323
    %812 = vmatprep.subr.mxu0 0.0
    %813 = vmatpush1.msra.mxu0 %v328
    %814 = vmatprep.subr.mxu0 0.0
    %815 = vmatpush1.msra.mxu0 %v333
    %816 = vmatprep.subr.mxu0 0.0
    %817 = vmatpush1.msra.mxu0 %v338
    %818 = vmatprep.subr.mxu0 0.0
    %819 = vmatpush1.msra.mxu0 %v343
    %820 = vmatprep.subr.mxu0 0.0
    %821 = vmatpush1.msra.mxu0 0.0
    %822 = vmatprep.subr.mxu0 0.0
    %823 = vmatpush1.msra.mxu0 0.0
    %824 = vmatprep.subr.mxu0 0.0
    %825 = vmatpush1.msra.mxu0 0.0
    %826 = vmatprep.subr.mxu0 0.0
    %827 = vmatpush1.msra.mxu0 0.0
    %828 = vmatprep.subr.mxu0 0.0
    %829 = vmatpush1.msra.mxu0 0.0
    %830 = vmatprep.subr.mxu0 0.0
    %831 = vmatpush1.msra.mxu0 0.0
    %832 = vmatprep.subr.mxu0 0.0
    %833 = vmatpush1.msra.mxu0 0.0
    %834 = vmatprep.subr.mxu0 0.0
    %835 = vmatpush1.msra.mxu0 0.0
    %836 = vmatprep.subr.mxu0 0.0
    %837 = vmatpush1.msra.mxu0 0.0
    %838 = vmatprep.subr.mxu0 0.0
    %839 = vmatpush1.msra.mxu0 0.0
    %840 = vmatprep.subr.mxu0 0.0
    %841 = vmatpush1.msra.mxu0 0.0
    %842 = vmatprep.subr.mxu0 0.0
    %843 = vmatpush1.msra.mxu0 0.0
    %844 = vmatprep.mubr.f32.mxu0 %v636
    %845 = vmatmul.mubr.f32.gmra.mrb[0].mxu0 %v633
    %v846 = vpop.f32.mrb[0].mxu0
    %v847 = vadd.f32 0.0, %v846
    %v848 = vpop.f32.mrb[0].mxu0
    %849 = vdwg.mxu0
    %v854 = vrot.slane %v705, 6
    %v855 = vrot.slane %v707, 6
    %v856 = vrot.slane %v776, 6
    %v857 = vrot.slane %v778, 6
    %v862 = vadd.f32 %v144, %v854
    %v863 = vadd.f32 %v146, %v855
    %v864 = vadd.f32 %v215, %v856
    %v865 = vadd.f32 %v217, %v857
    %v866 = vadd.f32 %v847, %v219
    %v867 = vxor.u32 %v862, 2147483648
    %v868 = vxor.u32 %v863, 2147483648
    %v869 = vxor.u32 %v864, 2147483648
    %v870 = vmul.f32 %v867, 1.442695
    %v871 = vpow.pop %v870
    %v872 = vmul.f32 %v868, 1.442695
    %v873 = vpow.pop %v872
    %v874 = vmul.f32 %v869, 1.442695
    %v875 = vpow.pop %v874
    %v876 = vadd.f32 %v871, 1.0
    %v877 = vadd.f32 %v873, 1.0
    %v878 = vadd.f32 %v875, 1.0
    %v879 = vrcp.pop %v876
    %v880 = vmul.f32 1.0, %v879
    %v881 = vrcp.pop %v877
    %v882 = vmul.f32 1.0, %v881
    %v883 = vrcp.pop %v878
    %v884 = vmul.f32 1.0, %v883
    %v885 = vtanh.pop %v865
    %v887 = vrot.slane %v601, 7
    %v889 = vmul.f32 %v882, %v887
    %v890 = vmul.f32 %v880, %v885
    %v891 = vadd.f32 %v889, %v890
    %v892 = vtanh.pop %v891
    %v893 = vmul.f32 %v884, %v892
    %v894 = vxor.u32 %v866, 2147483648
    %v895 = vmul.f32 %v894, 1.442695
    %v896 = vpow.pop %v895
    %v897 = vadd.f32 %v896, 1.0
    %v898 = vrcp.pop %v897
    %v899 = vmul.f32 1.0, %v898
    %v900 = vtanh.pop %v866
    %v901 = vmul.f32 %v899, %v621
    %903 = vrot.lane.b32.xlu0 %v900, 32
    %v904 = vpop.permute.xlu0 %903
    %v906 = vmul.f32 %v899, %v904
    %908 = vrot.lane.b32.xlu0 %v906, 32
    %v909 = vpop.permute.xlu0 %908
    %v911 = vadd.f32 %v901, %v909
    %v912 = vtanh.pop %v911
    %914 = vrot.lane.b32.xlu0 %v912, 32
    %v915 = vpop.permute.xlu0 %914
    %v917 = vmul.f32 %v899, %v915
    %v919 = vrot.slane %v917, 6
    %920 = vrot.lane.b32.xlu0 %v919, 64
    %v921 = vpop.permute.xlu0 %920
    %v923 = vrot.slane %v893, 2
    %v924 = vrot.slane %v921, 2
    %v926 = vsel %vm344, %v924, 0
    %928 = vmatprep.subr.mxu0 %v245
    %929 = vmatpush1.msra.mxu0 %v244
    %930 = vmatprep.subr.mxu0 %v250
    %931 = vmatpush1.msra.mxu0 %v249
    %932 = vmatprep.subr.mxu0 %v255
    %933 = vmatpush1.msra.mxu0 %v254
    %934 = vmatprep.subr.mxu0 %v260
    %935 = vmatpush1.msra.mxu0 %v259
    %936 = vmatprep.subr.mxu0 %v265
    %937 = vmatpush1.msra.mxu0 %v264
    %938 = vmatprep.subr.mxu0 %v270
    %939 = vmatpush1.msra.mxu0 %v269
    %940 = vmatprep.subr.mxu0 %v275
    %941 = vmatpush1.msra.mxu0 %v274
    %942 = vmatprep.subr.mxu0 %v280
    %943 = vmatpush1.msra.mxu0 %v279
    %944 = vmatprep.subr.mxu0 %v285
    %945 = vmatpush1.msra.mxu0 %v284
    %946 = vmatprep.subr.mxu0 %v290
    %947 = vmatpush1.msra.mxu0 %v289
    %948 = vmatprep.subr.mxu0 %v295
    %949 = vmatpush1.msra.mxu0 %v294
    %950 = vmatprep.subr.mxu0 %v300
    %951 = vmatpush1.msra.mxu0 %v299
    %952 = vmatprep.subr.mxu0 %v305
    %953 = vmatpush1.msra.mxu0 %v304
    %954 = vmatprep.subr.mxu0 %v310
    %955 = vmatpush1.msra.mxu0 %v309
    %956 = vmatprep.subr.mxu0 %v315
    %957 = vmatpush1.msra.mxu0 %v314
    %958 = vmatprep.subr.mxu0 %v320
    %959 = vmatpush1.msra.mxu0 %v319
    %960 = vmatprep.subr.mxu0 %v325
    %961 = vmatpush1.msra.mxu0 %v324
    %962 = vmatprep.subr.mxu0 %v330
    %963 = vmatpush1.msra.mxu0 %v329
    %964 = vmatprep.subr.mxu0 %v335
    %965 = vmatpush1.msra.mxu0 %v334
    %966 = vmatprep.subr.mxu0 %v340
    %967 = vmatpush1.msra.mxu0 %v339
    %968 = vmatprep.subr.mxu0 0.0
    %969 = vmatpush1.msra.mxu0 0.0
    %970 = vmatprep.subr.mxu0 0.0
    %971 = vmatpush1.msra.mxu0 0.0
    %972 = vmatprep.subr.mxu0 0.0
    %973 = vmatpush1.msra.mxu0 0.0
    %974 = vmatprep.subr.mxu0 0.0
    %975 = vmatpush1.msra.mxu0 0.0
    %976 = vmatprep.subr.mxu0 0.0
    %977 = vmatpush1.msra.mxu0 0.0
    %978 = vmatprep.subr.mxu0 0.0
    %979 = vmatpush1.msra.mxu0 0.0
    %980 = vmatprep.subr.mxu0 0.0
    %981 = vmatpush1.msra.mxu0 0.0
    %982 = vmatprep.subr.mxu0 0.0
    %983 = vmatpush1.msra.mxu0 0.0
    %984 = vmatprep.subr.mxu0 0.0
    %985 = vmatpush1.msra.mxu0 0.0
    %986 = vmatprep.subr.mxu0 0.0
    %987 = vmatpush1.msra.mxu0 0.0
    %988 = vmatprep.subr.mxu0 0.0
    %989 = vmatpush1.msra.mxu0 0.0
    %990 = vmatprep.subr.mxu0 0.0
    %991 = vmatpush1.msra.mxu0 0.0
    %992 = vmatprep.mubr.f32.mxu0 %v926
    %993 = vmatmul.mubr.f32.gmra.mrb[0].mxu0 %v923
    %v994 = vpop.f32.mrb[0].mxu0
    %v995 = vadd.f32 0.0, %v994
    %v996 = vpop.f32.mrb[0].mxu0
    %v997 = vadd.f32 0.0, %v996
    %998 = vdwg.mxu0
    %999 = vmatprep.subr.mxu0 %v247
    %1000 = vmatpush1.msra.mxu0 %v246
    %1001 = vmatprep.subr.mxu0 %v252
    %1002 = vmatpush1.msra.mxu0 %v251
    %1003 = vmatprep.subr.mxu0 %v257
    %1004 = vmatpush1.msra.mxu0 %v256
    %1005 = vmatprep.subr.mxu0 %v262
    %1006 = vmatpush1.msra.mxu0 %v261
    %1007 = vmatprep.subr.mxu0 %v267
    %1008 = vmatpush1.msra.mxu0 %v266
    %1009 = vmatprep.subr.mxu0 %v272
    %1010 = vmatpush1.msra.mxu0 %v271
    %1011 = vmatprep.subr.mxu0 %v277
    %1012 = vmatpush1.msra.mxu0 %v276
    %1013 = vmatprep.subr.mxu0 %v282
    %1014 = vmatpush1.msra.mxu0 %v281
    %1015 = vmatprep.subr.mxu0 %v287
    %1016 = vmatpush1.msra.mxu0 %v286
    %1017 = vmatprep.subr.mxu0 %v292
    %1018 = vmatpush1.msra.mxu0 %v291
    %1019 = vmatprep.subr.mxu0 %v297
    %1020 = vmatpush1.msra.mxu0 %v296
    %1021 = vmatprep.subr.mxu0 %v302
    %1022 = vmatpush1.msra.mxu0 %v301
    %1023 = vmatprep.subr.mxu0 %v307
    %1024 = vmatpush1.msra.mxu0 %v306
    %1025 = vmatprep.subr.mxu0 %v312
    %1026 = vmatpush1.msra.mxu0 %v311
    %1027 = vmatprep.subr.mxu0 %v317
    %1028 = vmatpush1.msra.mxu0 %v316
    %1029 = vmatprep.subr.mxu0 %v322
    %1030 = vmatpush1.msra.mxu0 %v321
    %1031 = vmatprep.subr.mxu0 %v327
    %1032 = vmatpush1.msra.mxu0 %v326
    %1033 = vmatprep.subr.mxu0 %v332
    %1034 = vmatpush1.msra.mxu0 %v331
    %1035 = vmatprep.subr.mxu0 %v337
    %1036 = vmatpush1.msra.mxu0 %v336
    %1037 = vmatprep.subr.mxu0 %v342
    %1038 = vmatpush1.msra.mxu0 %v341
    %1039 = vmatprep.subr.mxu0 0.0
    %1040 = vmatpush1.msra.mxu0 0.0
    %1041 = vmatprep.subr.mxu0 0.0
    %1042 = vmatpush1.msra.mxu0 0.0
    %1043 = vmatprep.subr.mxu0 0.0
    %1044 = vmatpush1.msra.mxu0 0.0
    %1045 = vmatprep.subr.mxu0 0.0
    %1046 = vmatpush1.msra.mxu0 0.0
    %1047 = vmatprep.subr.mxu0 0.0
    %1048 = vmatpush1.msra.mxu0 0.0
    %1049 = vmatprep.subr.mxu0 0.0
    %1050 = vmatpush1.msra.mxu0 0.0
    %1051 = vmatprep.subr.mxu0 0.0
    %1052 = vmatpush1.msra.mxu0 0.0
    %1053 = vmatprep.subr.mxu0 0.0
    %1054 = vmatpush1.msra.mxu0 0.0
    %1055 = vmatprep.subr.mxu0 0.0
    %1056 = vmatpush1.msra.mxu0 0.0
    %1057 = vmatprep.subr.mxu0 0.0
    %1058 = vmatpush1.msra.mxu0 0.0
    %1059 = vmatprep.subr.mxu0 0.0
    %1060 = vmatpush1.msra.mxu0 0.0
    %1061 = vmatprep.subr.mxu0 0.0
    %1062 = vmatpush1.msra.mxu0 0.0
    %1063 = vmatprep.mubr.f32.mxu0 %v926
    %1064 = vmatmul.mubr.f32.gmra.mrb[0].mxu0 %v923
    %v1065 = vpop.f32.mrb[0].mxu0
    %v1066 = vadd.f32 0.0, %v1065
    %v1067 = vpop.f32.mrb[0].mxu0
    %v1068 = vadd.f32 0.0, %v1067
    %1069 = vdwg.mxu0
    %1070 = vmatprep.subr.mxu0 0.0
    %1071 = vmatpush1.msra.mxu0 %v248
    %1072 = vmatprep.subr.mxu0 0.0
    %1073 = vmatpush1.msra.mxu0 %v253
    %1074 = vmatprep.subr.mxu0 0.0
    %1075 = vmatpush1.msra.mxu0 %v258
    %1076 = vmatprep.subr.mxu0 0.0
    %1077 = vmatpush1.msra.mxu0 %v263
    %1078 = vmatprep.subr.mxu0 0.0
    %1079 = vmatpush1.msra.mxu0 %v268
    %1080 = vmatprep.subr.mxu0 0.0
    %1081 = vmatpush1.msra.mxu0 %v273
    %1082 = vmatprep.subr.mxu0 0.0
    %1083 = vmatpush1.msra.mxu0 %v278
    %1084 = vmatprep.subr.mxu0 0.0
    %1085 = vmatpush1.msra.mxu0 %v283
    %1086 = vmatprep.subr.mxu0 0.0
    %1087 = vmatpush1.msra.mxu0 %v288
    %1088 = vmatprep.subr.mxu0 0.0
    %1089 = vmatpush1.msra.mxu0 %v293
    %1090 = vmatprep.subr.mxu0 0.0
    %1091 = vmatpush1.msra.mxu0 %v298
    %1092 = vmatprep.subr.mxu0 0.0
    %1093 = vmatpush1.msra.mxu0 %v303
    %1094 = vmatprep.subr.mxu0 0.0
    %1095 = vmatpush1.msra.mxu0 %v308
    %1096 = vmatprep.subr.mxu0 0.0
    %1097 = vmatpush1.msra.mxu0 %v313
    %1098 = vmatprep.subr.mxu0 0.0
    %1099 = vmatpush1.msra.mxu0 %v318
    %1100 = vmatprep.subr.mxu0 0.0
    %1101 = vmatpush1.msra.mxu0 %v323
    %1102 = vmatprep.subr.mxu0 0.0
    %1103 = vmatpush1.msra.mxu0 %v328
    %1104 = vmatprep.subr.mxu0 0.0
    %1105 = vmatpush1.msra.mxu0 %v333
    %1106 = vmatprep.subr.mxu0 0.0
    %1107 = vmatpush1.msra.mxu0 %v338
    %1108 = vmatprep.subr.mxu0 0.0
    %1109 = vmatpush1.msra.mxu0 %v343
    %1110 = vmatprep.subr.mxu0 0.0
    %1111 = vmatpush1.msra.mxu0 0.0
    %1112 = vmatprep.subr.mxu0 0.0
    %1113 = vmatpush1.msra.mxu0 0.0
    %1114 = vmatprep.subr.mxu0 0.0
    %1115 = vmatpush1.msra.mxu0 0.0
    %1116 = vmatprep.subr.mxu0 0.0
    %1117 = vmatpush1.msra.mxu0 0.0
    %1118 = vmatprep.subr.mxu0 0.0
    %1119 = vmatpush1.msra.mxu0 0.0
    %1120 = vmatprep.subr.mxu0 0.0
    %1121 = vmatpush1.msra.mxu0 0.0
    %1122 = vmatprep.subr.mxu0 0.0
    %1123 = vmatpush1.msra.mxu0 0.0
    %1124 = vmatprep.subr.mxu0 0.0
    %1125 = vmatpush1.msra.mxu0 0.0
    %1126 = vmatprep.subr.mxu0 0.0
    %1127 = vmatpush1.msra.mxu0 0.0
    %1128 = vmatprep.subr.mxu0 0.0
    %1129 = vmatpush1.msra.mxu0 0.0
    %1130 = vmatprep.subr.mxu0 0.0
    %1131 = vmatpush1.msra.mxu0 0.0
    %1132 = vmatprep.subr.mxu0 0.0
    %1133 = vmatpush1.msra.mxu0 0.0
    %1134 = vmatprep.mubr.f32.mxu0 %v926
    %1135 = vmatmul.mubr.f32.gmra.mrb[0].mxu0 %v923
    %v1136 = vpop.f32.mrb[0].mxu0
    %v1137 = vadd.f32 0.0, %v1136
    %v1138 = vpop.f32.mrb[0].mxu0
    %1139 = vdwg.mxu0
    %v1144 = vrot.slane %v995, 5
    %v1145 = vrot.slane %v997, 5
    %v1146 = vrot.slane %v1066, 5
    %v1147 = vrot.slane %v1068, 5
    %v1152 = vadd.f32 %v144, %v1144
    %v1153 = vadd.f32 %v146, %v1145
    %v1154 = vadd.f32 %v215, %v1146
    %v1155 = vadd.f32 %v217, %v1147
    %v1156 = vadd.f32 %v1137, %v219
    %v1157 = vxor.u32 %v1152, 2147483648
    %v1158 = vxor.u32 %v1153, 2147483648
    %v1159 = vxor.u32 %v1154, 2147483648
    %v1160 = vmul.f32 %v1157, 1.442695
    %v1161 = vpow.pop %v1160
    %v1162 = vmul.f32 %v1158, 1.442695
    %v1163 = vpow.pop %v1162
    %v1164 = vmul.f32 %v1159, 1.442695
    %v1165 = vpow.pop %v1164
    %v1166 = vadd.f32 %v1161, 1.0
    %v1167 = vadd.f32 %v1163, 1.0
    %v1168 = vadd.f32 %v1165, 1.0
    %v1169 = vrcp.pop %v1166
    %v1170 = vmul.f32 1.0, %v1169
    %v1171 = vrcp.pop %v1167
    %v1172 = vmul.f32 1.0, %v1171
    %v1173 = vrcp.pop %v1168
    %v1174 = vmul.f32 1.0, %v1173
    %v1175 = vtanh.pop %v1155
    %v1177 = vrot.slane %v891, 7
    %v1179 = vmul.f32 %v1172, %v1177
    %v1180 = vmul.f32 %v1170, %v1175
    %v1181 = vadd.f32 %v1179, %v1180
    %v1182 = vtanh.pop %v1181
    %v1183 = vmul.f32 %v1174, %v1182
    %v1184 = vxor.u32 %v1156, 2147483648
    %v1185 = vmul.f32 %v1184, 1.442695
    %v1186 = vpow.pop %v1185
    %v1187 = vadd.f32 %v1186, 1.0
    %v1188 = vrcp.pop %v1187
    %v1189 = vmul.f32 1.0, %v1188
    %v1190 = vtanh.pop %v1156
    %v1191 = vmul.f32 %v1189, %v911
    %1193 = vrot.lane.b32.xlu0 %v1190, 32
    %v1194 = vpop.permute.xlu0 %1193
    %v1196 = vmul.f32 %v1189, %v1194
    %1198 = vrot.lane.b32.xlu0 %v1196, 32
    %v1199 = vpop.permute.xlu0 %1198
    %v1201 = vadd.f32 %v1191, %v1199
    %v1202 = vtanh.pop %v1201
    %1204 = vrot.lane.b32.xlu0 %v1202, 32
    %v1205 = vpop.permute.xlu0 %1204
    %v1207 = vmul.f32 %v1189, %v1205
    %v1209 = vrot.slane %v1207, 5
    %1210 = vrot.lane.b32.xlu0 %v1209, 64
    %v1211 = vpop.permute.xlu0 %1210
    %v1213 = vrot.slane %v1183, 3
    %v1214 = vrot.slane %v1211, 3
    %v1216 = vsel %vm344, %v1214, 0
    %1218 = vmatprep.subr.mxu0 %v245
    %1219 = vmatpush1.msra.mxu0 %v244
    %1220 = vmatprep.subr.mxu0 %v250
    %1221 = vmatpush1.msra.mxu0 %v249
    %1222 = vmatprep.subr.mxu0 %v255
    %1223 = vmatpush1.msra.mxu0 %v254
    %1224 = vmatprep.subr.mxu0 %v260
    %1225 = vmatpush1.msra.mxu0 %v259
    %1226 = vmatprep.subr.mxu0 %v265
    %1227 = vmatpush1.msra.mxu0 %v264
    %1228 = vmatprep.subr.mxu0 %v270
    %1229 = vmatpush1.msra.mxu0 %v269
    %1230 = vmatprep.subr.mxu0 %v275
    %1231 = vmatpush1.msra.mxu0 %v274
    %1232 = vmatprep.subr.mxu0 %v280
    %1233 = vmatpush1.msra.mxu0 %v279
    %1234 = vmatprep.subr.mxu0 %v285
    %1235 = vmatpush1.msra.mxu0 %v284
    %1236 = vmatprep.subr.mxu0 %v290
    %1237 = vmatpush1.msra.mxu0 %v289
    %1238 = vmatprep.subr.mxu0 %v295
    %1239 = vmatpush1.msra.mxu0 %v294
    %1240 = vmatprep.subr.mxu0 %v300
    %1241 = vmatpush1.msra.mxu0 %v299
    %1242 = vmatprep.subr.mxu0 %v305
    %1243 = vmatpush1.msra.mxu0 %v304
    %1244 = vmatprep.subr.mxu0 %v310
    %1245 = vmatpush1.msra.mxu0 %v309
    %1246 = vmatprep.subr.mxu0 %v315
    %1247 = vmatpush1.msra.mxu0 %v314
    %1248 = vmatprep.subr.mxu0 %v320
    %1249 = vmatpush1.msra.mxu0 %v319
    %1250 = vmatprep.subr.mxu0 %v325
    %1251 = vmatpush1.msra.mxu0 %v324
    %1252 = vmatprep.subr.mxu0 %v330
    %1253 = vmatpush1.msra.mxu0 %v329
    %1254 = vmatprep.subr.mxu0 %v335
    %1255 = vmatpush1.msra.mxu0 %v334
    %1256 = vmatprep.subr.mxu0 %v340
    %1257 = vmatpush1.msra.mxu0 %v339
    %1258 = vmatprep.subr.mxu0 0.0
    %1259 = vmatpush1.msra.mxu0 0.0
    %1260 = vmatprep.subr.mxu0 0.0
    %1261 = vmatpush1.msra.mxu0 0.0
    %1262 = vmatprep.subr.mxu0 0.0
    %1263 = vmatpush1.msra.mxu0 0.0
    %1264 = vmatprep.subr.mxu0 0.0
    %1265 = vmatpush1.msra.mxu0 0.0
    %1266 = vmatprep.subr.mxu0 0.0
    %1267 = vmatpush1.msra.mxu0 0.0
    %1268 = vmatprep.subr.mxu0 0.0
    %1269 = vmatpush1.msra.mxu0 0.0
    %1270 = vmatprep.subr.mxu0 0.0
    %1271 = vmatpush1.msra.mxu0 0.0
    %1272 = vmatprep.subr.mxu0 0.0
    %1273 = vmatpush1.msra.mxu0 0.0
    %1274 = vmatprep.subr.mxu0 0.0
    %1275 = vmatpush1.msra.mxu0 0.0
    %1276 = vmatprep.subr.mxu0 0.0
    %1277 = vmatpush1.msra.mxu0 0.0
    %1278 = vmatprep.subr.mxu0 0.0
    %1279 = vmatpush1.msra.mxu0 0.0
    %1280 = vmatprep.subr.mxu0 0.0
    %1281 = vmatpush1.msra.mxu0 0.0
    %1282 = vmatprep.mubr.f32.mxu0 %v1216
    %1283 = vmatmul.mubr.f32.gmra.mrb[0].mxu0 %v1213
    %v1284 = vpop.f32.mrb[0].mxu0
    %v1285 = vadd.f32 0.0, %v1284
    %v1286 = vpop.f32.mrb[0].mxu0
    %v1287 = vadd.f32 0.0, %v1286
    %1288 = vdwg.mxu0
    %1289 = vmatprep.subr.mxu0 %v247
    %1290 = vmatpush1.msra.mxu0 %v246
    %1291 = vmatprep.subr.mxu0 %v252
    %1292 = vmatpush1.msra.mxu0 %v251
    %1293 = vmatprep.subr.mxu0 %v257
    %1294 = vmatpush1.msra.mxu0 %v256
    %1295 = vmatprep.subr.mxu0 %v262
    %1296 = vmatpush1.msra.mxu0 %v261
    %1297 = vmatprep.subr.mxu0 %v267
    %1298 = vmatpush1.msra.mxu0 %v266
    %1299 = vmatprep.subr.mxu0 %v272
    %1300 = vmatpush1.msra.mxu0 %v271
    %1301 = vmatprep.subr.mxu0 %v277
    %1302 = vmatpush1.msra.mxu0 %v276
    %1303 = vmatprep.subr.mxu0 %v282
    %1304 = vmatpush1.msra.mxu0 %v281
    %1305 = vmatprep.subr.mxu0 %v287
    %1306 = vmatpush1.msra.mxu0 %v286
    %1307 = vmatprep.subr.mxu0 %v292
    %1308 = vmatpush1.msra.mxu0 %v291
    %1309 = vmatprep.subr.mxu0 %v297
    %1310 = vmatpush1.msra.mxu0 %v296
    %1311 = vmatprep.subr.mxu0 %v302
    %1312 = vmatpush1.msra.mxu0 %v301
    %1313 = vmatprep.subr.mxu0 %v307
    %1314 = vmatpush1.msra.mxu0 %v306
    %1315 = vmatprep.subr.mxu0 %v312
    %1316 = vmatpush1.msra.mxu0 %v311
    %1317 = vmatprep.subr.mxu0 %v317
    %1318 = vmatpush1.msra.mxu0 %v316
    %1319 = vmatprep.subr.mxu0 %v322
    %1320 = vmatpush1.msra.mxu0 %v321
    %1321 = vmatprep.subr.mxu0 %v327
    %1322 = vmatpush1.msra.mxu0 %v326
    %1323 = vmatprep.subr.mxu0 %v332
    %1324 = vmatpush1.msra.mxu0 %v331
    %1325 = vmatprep.subr.mxu0 %v337
    %1326 = vmatpush1.msra.mxu0 %v336
    %1327 = vmatprep.subr.mxu0 %v342
    %1328 = vmatpush1.msra.mxu0 %v341
    %1329 = vmatprep.subr.mxu0 0.0
    %1330 = vmatpush1.msra.mxu0 0.0
    %1331 = vmatprep.subr.mxu0 0.0
    %1332 = vmatpush1.msra.mxu0 0.0
    %1333 = vmatprep.subr.mxu0 0.0
    %1334 = vmatpush1.msra.mxu0 0.0
    %1335 = vmatprep.subr.mxu0 0.0
    %1336 = vmatpush1.msra.mxu0 0.0
    %1337 = vmatprep.subr.mxu0 0.0
    %1338 = vmatpush1.msra.mxu0 0.0
    %1339 = vmatprep.subr.mxu0 0.0
    %1340 = vmatpush1.msra.mxu0 0.0
    %1341 = vmatprep.subr.mxu0 0.0
    %1342 = vmatpush1.msra.mxu0 0.0
    %1343 = vmatprep.subr.mxu0 0.0
    %1344 = vmatpush1.msra.mxu0 0.0
    %1345 = vmatprep.subr.mxu0 0.0
    %1346 = vmatpush1.msra.mxu0 0.0
    %1347 = vmatprep.subr.mxu0 0.0
    %1348 = vmatpush1.msra.mxu0 0.0
    %1349 = vmatprep.subr.mxu0 0.0
    %1350 = vmatpush1.msra.mxu0 0.0
    %1351 = vmatprep.subr.mxu0 0.0
    %1352 = vmatpush1.msra.mxu0 0.0
    %1353 = vmatprep.mubr.f32.mxu0 %v1216
    %1354 = vmatmul.mubr.f32.gmra.mrb[0].mxu0 %v1213
    %v1355 = vpop.f32.mrb[0].mxu0
    %v1356 = vadd.f32 0.0, %v1355
    %v1357 = vpop.f32.mrb[0].mxu0
    %v1358 = vadd.f32 0.0, %v1357
    %1359 = vdwg.mxu0
    %1360 = vmatprep.subr.mxu0 0.0
    %1361 = vmatpush1.msra.mxu0 %v248
    %1362 = vmatprep.subr.mxu0 0.0
    %1363 = vmatpush1.msra.mxu0 %v253
    %1364 = vmatprep.subr.mxu0 0.0
    %1365 = vmatpush1.msra.mxu0 %v258
    %1366 = vmatprep.subr.mxu0 0.0
    %1367 = vmatpush1.msra.mxu0 %v263
    %1368 = vmatprep.subr.mxu0 0.0
    %1369 = vmatpush1.msra.mxu0 %v268
    %1370 = vmatprep.subr.mxu0 0.0
    %1371 = vmatpush1.msra.mxu0 %v273
    %1372 = vmatprep.subr.mxu0 0.0
    %1373 = vmatpush1.msra.mxu0 %v278
    %1374 = vmatprep.subr.mxu0 0.0
    %1375 = vmatpush1.msra.mxu0 %v283
    %1376 = vmatprep.subr.mxu0 0.0
    %1377 = vmatpush1.msra.mxu0 %v288
    %1378 = vmatprep.subr.mxu0 0.0
    %1379 = vmatpush1.msra.mxu0 %v293
    %1380 = vmatprep.subr.mxu0 0.0
    %1381 = vmatpush1.msra.mxu0 %v298
    %1382 = vmatprep.subr.mxu0 0.0
    %1383 = vmatpush1.msra.mxu0 %v303
    %1384 = vmatprep.subr.mxu0 0.0
    %1385 = vmatpush1.msra.mxu0 %v308
    %1386 = vmatprep.subr.mxu0 0.0
    %1387 = vmatpush1.msra.mxu0 %v313
    %1388 = vmatprep.subr.mxu0 0.0
    %1389 = vmatpush1.msra.mxu0 %v318
    %1390 = vmatprep.subr.mxu0 0.0
    %1391 = vmatpush1.msra.mxu0 %v323
    %1392 = vmatprep.subr.mxu0 0.0
    %1393 = vmatpush1.msra.mxu0 %v328
    %1394 = vmatprep.subr.mxu0 0.0
    %1395 = vmatpush1.msra.mxu0 %v333
    %1396 = vmatprep.subr.mxu0 0.0
    %1397 = vmatpush1.msra.mxu0 %v338
    %1398 = vmatprep.subr.mxu0 0.0
    %1399 = vmatpush1.msra.mxu0 %v343
    %1400 = vmatprep.subr.mxu0 0.0
    %1401 = vmatpush1.msra.mxu0 0.0
    %1402 = vmatprep.subr.mxu0 0.0
    %1403 = vmatpush1.msra.mxu0 0.0
    %1404 = vmatprep.subr.mxu0 0.0
    %1405 = vmatpush1.msra.mxu0 0.0
    %1406 = vmatprep.subr.mxu0 0.0
    %1407 = vmatpush1.msra.mxu0 0.0
    %1408 = vmatprep.subr.mxu0 0.0
    %1409 = vmatpush1.msra.mxu0 0.0
    %1410 = vmatprep.subr.mxu0 0.0
    %1411 = vmatpush1.msra.mxu0 0.0
    %1412 = vmatprep.subr.mxu0 0.0
    %1413 = vmatpush1.msra.mxu0 0.0
    %1414 = vmatprep.subr.mxu0 0.0
    %1415 = vmatpush1.msra.mxu0 0.0
    %1416 = vmatprep.subr.mxu0 0.0
    %1417 = vmatpush1.msra.mxu0 0.0
    %1418 = vmatprep.subr.mxu0 0.0
    %1419 = vmatpush1.msra.mxu0 0.0
    %1420 = vmatprep.subr.mxu0 0.0
    %1421 = vmatpush1.msra.mxu0 0.0
    %1422 = vmatprep.subr.mxu0 0.0
    %1423 = vmatpush1.msra.mxu0 0.0
    %1424 = vmatprep.mubr.f32.mxu0 %v1216
    %1425 = vmatmul.mubr.f32.gmra.mrb[0].mxu0 %v1213
    %v1426 = vpop.f32.mrb[0].mxu0
    %v1427 = vadd.f32 0.0, %v1426
    %v1428 = vpop.f32.mrb[0].mxu0
    %1429 = vdwg.mxu0
    %v1434 = vrot.slane %v1285, 4
    %v1435 = vrot.slane %v1287, 4
    %v1436 = vrot.slane %v1356, 4
    %v1437 = vrot.slane %v1358, 4
    %v1442 = vadd.f32 %v144, %v1434
    %v1443 = vadd.f32 %v146, %v1435
    %v1444 = vadd.f32 %v215, %v1436
    %v1445 = vadd.f32 %v217, %v1437
    %v1446 = vadd.f32 %v1427, %v219
    %v1447 = vxor.u32 %v1442, 2147483648
    %v1448 = vxor.u32 %v1443, 2147483648
    %v1449 = vxor.u32 %v1444, 2147483648
    %v1450 = vmul.f32 %v1447, 1.442695
    %v1451 = vpow.pop %v1450
    %v1452 = vmul.f32 %v1448, 1.442695
    %v1453 = vpow.pop %v1452
    %v1454 = vmul.f32 %v1449, 1.442695
    %v1455 = vpow.pop %v1454
    %v1456 = vadd.f32 %v1451, 1.0
    %v1457 = vadd.f32 %v1453, 1.0
    %v1458 = vadd.f32 %v1455, 1.0
    %v1459 = vrcp.pop %v1456
    %v1460 = vmul.f32 1.0, %v1459
    %v1461 = vrcp.pop %v1457
    %v1462 = vmul.f32 1.0, %v1461
    %v1463 = vrcp.pop %v1458
    %v1464 = vmul.f32 1.0, %v1463
    %v1465 = vtanh.pop %v1445
    %v1467 = vrot.slane %v1181, 7
    %v1469 = vmul.f32 %v1462, %v1467
    %v1470 = vmul.f32 %v1460, %v1465
    %v1471 = vadd.f32 %v1469, %v1470
    %v1472 = vtanh.pop %v1471
    %v1473 = vmul.f32 %v1464, %v1472
    %v1474 = vxor.u32 %v1446, 2147483648
    %v1475 = vmul.f32 %v1474, 1.442695
    %v1476 = vpow.pop %v1475
    %v1477 = vadd.f32 %v1476, 1.0
    %v1478 = vrcp.pop %v1477
    %v1479 = vmul.f32 1.0, %v1478
    %v1480 = vtanh.pop %v1446
    %v1481 = vmul.f32 %v1479, %v1201
    %1483 = vrot.lane.b32.xlu0 %v1480, 32
    %v1484 = vpop.permute.xlu0 %1483
    %v1486 = vmul.f32 %v1479, %v1484
    %1488 = vrot.lane.b32.xlu0 %v1486, 32
    %v1489 = vpop.permute.xlu0 %1488
    %v1491 = vadd.f32 %v1481, %v1489
    %v1492 = vtanh.pop %v1491
    %1494 = vrot.lane.b32.xlu0 %v1492, 32
    %v1495 = vpop.permute.xlu0 %1494
    %v1497 = vmul.f32 %v1479, %v1495
    %v1499 = vrot.slane %v1497, 4
    %1500 = vrot.lane.b32.xlu0 %v1499, 64
    %v1501 = vpop.permute.xlu0 %1500
    %v1503 = vrot.slane %v1473, 4
    %v1504 = vrot.slane %v1501, 4
    %v1506 = vsel %vm344, %v1504, 0
    %1508 = vmatprep.subr.mxu0 %v245
    %1509 = vmatpush1.msra.mxu0 %v244
    %1510 = vmatprep.subr.mxu0 %v250
    %1511 = vmatpush1.msra.mxu0 %v249
    %1512 = vmatprep.subr.mxu0 %v255
    %1513 = vmatpush1.msra.mxu0 %v254
    %1514 = vmatprep.subr.mxu0 %v260
    %1515 = vmatpush1.msra.mxu0 %v259
    %1516 = vmatprep.subr.mxu0 %v265
    %1517 = vmatpush1.msra.mxu0 %v264
    %1518 = vmatprep.subr.mxu0 %v270
    %1519 = vmatpush1.msra.mxu0 %v269
    %1520 = vmatprep.subr.mxu0 %v275
    %1521 = vmatpush1.msra.mxu0 %v274
    %1522 = vmatprep.subr.mxu0 %v280
    %1523 = vmatpush1.msra.mxu0 %v279
    %1524 = vmatprep.subr.mxu0 %v285
    %1525 = vmatpush1.msra.mxu0 %v284
    %1526 = vmatprep.subr.mxu0 %v290
    %1527 = vmatpush1.msra.mxu0 %v289
    %1528 = vmatprep.subr.mxu0 %v295
    %1529 = vmatpush1.msra.mxu0 %v294
    %1530 = vmatprep.subr.mxu0 %v300
    %1531 = vmatpush1.msra.mxu0 %v299
    %1532 = vmatprep.subr.mxu0 %v305
    %1533 = vmatpush1.msra.mxu0 %v304
    %1534 = vmatprep.subr.mxu0 %v310
    %1535 = vmatpush1.msra.mxu0 %v309
    %1536 = vmatprep.subr.mxu0 %v315
    %1537 = vmatpush1.msra.mxu0 %v314
    %1538 = vmatprep.subr.mxu0 %v320
    %1539 = vmatpush1.msra.mxu0 %v319
    %1540 = vmatprep.subr.mxu0 %v325
    %1541 = vmatpush1.msra.mxu0 %v324
    %1542 = vmatprep.subr.mxu0 %v330
    %1543 = vmatpush1.msra.mxu0 %v329
    %1544 = vmatprep.subr.mxu0 %v335
    %1545 = vmatpush1.msra.mxu0 %v334
    %1546 = vmatprep.subr.mxu0 %v340
    %1547 = vmatpush1.msra.mxu0 %v339
    %1548 = vmatprep.subr.mxu0 0.0
    %1549 = vmatpush1.msra.mxu0 0.0
    %1550 = vmatprep.subr.mxu0 0.0
    %1551 = vmatpush1.msra.mxu0 0.0
    %1552 = vmatprep.subr.mxu0 0.0
    %1553 = vmatpush1.msra.mxu0 0.0
    %1554 = vmatprep.subr.mxu0 0.0
    %1555 = vmatpush1.msra.mxu0 0.0
    %1556 = vmatprep.subr.mxu0 0.0
    %1557 = vmatpush1.msra.mxu0 0.0
    %1558 = vmatprep.subr.mxu0 0.0
    %1559 = vmatpush1.msra.mxu0 0.0
    %1560 = vmatprep.subr.mxu0 0.0
    %1561 = vmatpush1.msra.mxu0 0.0
    %1562 = vmatprep.subr.mxu0 0.0
    %1563 = vmatpush1.msra.mxu0 0.0
    %1564 = vmatprep.subr.mxu0 0.0
    %1565 = vmatpush1.msra.mxu0 0.0
    %1566 = vmatprep.subr.mxu0 0.0
    %1567 = vmatpush1.msra.mxu0 0.0
    %1568 = vmatprep.subr.mxu0 0.0
    %1569 = vmatpush1.msra.mxu0 0.0
    %1570 = vmatprep.subr.mxu0 0.0
    %1571 = vmatpush1.msra.mxu0 0.0
    %1572 = vmatprep.mubr.f32.mxu0 %v1506
    %1573 = vmatmul.mubr.f32.gmra.mrb[0].mxu0 %v1503
    %v1574 = vpop.f32.mrb[0].mxu0
    %v1575 = vadd.f32 0.0, %v1574
    %v1576 = vpop.f32.mrb[0].mxu0
    %v1577 = vadd.f32 0.0, %v1576
    %1578 = vdwg.mxu0
    %1579 = vmatprep.subr.mxu0 %v247
    %1580 = vmatpush1.msra.mxu0 %v246
    %1581 = vmatprep.subr.mxu0 %v252
    %1582 = vmatpush1.msra.mxu0 %v251
    %1583 = vmatprep.subr.mxu0 %v257
    %1584 = vmatpush1.msra.mxu0 %v256
    %1585 = vmatprep.subr.mxu0 %v262
    %1586 = vmatpush1.msra.mxu0 %v261
    %1587 = vmatprep.subr.mxu0 %v267
    %1588 = vmatpush1.msra.mxu0 %v266
    %1589 = vmatprep.subr.mxu0 %v272
    %1590 = vmatpush1.msra.mxu0 %v271
    %1591 = vmatprep.subr.mxu0 %v277
    %1592 = vmatpush1.msra.mxu0 %v276
    %1593 = vmatprep.subr.mxu0 %v282
    %1594 = vmatpush1.msra.mxu0 %v281
    %1595 = vmatprep.subr.mxu0 %v287
    %1596 = vmatpush1.msra.mxu0 %v286
    %1597 = vmatprep.subr.mxu0 %v292
    %1598 = vmatpush1.msra.mxu0 %v291
    %1599 = vmatprep.subr.mxu0 %v297
    %1600 = vmatpush1.msra.mxu0 %v296
    %1601 = vmatprep.subr.mxu0 %v302
    %1602 = vmatpush1.msra.mxu0 %v301
    %1603 = vmatprep.subr.mxu0 %v307
    %1604 = vmatpush1.msra.mxu0 %v306
    %1605 = vmatprep.subr.mxu0 %v312
    %1606 = vmatpush1.msra.mxu0 %v311
    %1607 = vmatprep.subr.mxu0 %v317
    %1608 = vmatpush1.msra.mxu0 %v316
    %1609 = vmatprep.subr.mxu0 %v322
    %1610 = vmatpush1.msra.mxu0 %v321
    %1611 = vmatprep.subr.mxu0 %v327
    %1612 = vmatpush1.msra.mxu0 %v326
    %1613 = vmatprep.subr.mxu0 %v332
    %1614 = vmatpush1.msra.mxu0 %v331
    %1615 = vmatprep.subr.mxu0 %v337
    %1616 = vmatpush1.msra.mxu0 %v336
    %1617 = vmatprep.subr.mxu0 %v342
    %1618 = vmatpush1.msra.mxu0 %v341
    %1619 = vmatprep.subr.mxu0 0.0
    %1620 = vmatpush1.msra.mxu0 0.0
    %1621 = vmatprep.subr.mxu0 0.0
    %1622 = vmatpush1.msra.mxu0 0.0
    %1623 = vmatprep.subr.mxu0 0.0
    %1624 = vmatpush1.msra.mxu0 0.0
    %1625 = vmatprep.subr.mxu0 0.0
    %1626 = vmatpush1.msra.mxu0 0.0
    %1627 = vmatprep.subr.mxu0 0.0
    %1628 = vmatpush1.msra.mxu0 0.0
    %1629 = vmatprep.subr.mxu0 0.0
    %1630 = vmatpush1.msra.mxu0 0.0
    %1631 = vmatprep.subr.mxu0 0.0
    %1632 = vmatpush1.msra.mxu0 0.0
    %1633 = vmatprep.subr.mxu0 0.0
    %1634 = vmatpush1.msra.mxu0 0.0
    %1635 = vmatprep.subr.mxu0 0.0
    %1636 = vmatpush1.msra.mxu0 0.0
    %1637 = vmatprep.subr.mxu0 0.0
    %1638 = vmatpush1.msra.mxu0 0.0
    %1639 = vmatprep.subr.mxu0 0.0
    %1640 = vmatpush1.msra.mxu0 0.0
    %1641 = vmatprep.subr.mxu0 0.0
    %1642 = vmatpush1.msra.mxu0 0.0
    %1643 = vmatprep.mubr.f32.mxu0 %v1506
    %1644 = vmatmul.mubr.f32.gmra.mrb[0].mxu0 %v1503
    %v1645 = vpop.f32.mrb[0].mxu0
    %v1646 = vadd.f32 0.0, %v1645
    %v1647 = vpop.f32.mrb[0].mxu0
    %v1648 = vadd.f32 0.0, %v1647
    %1649 = vdwg.mxu0
    %1650 = vmatprep.subr.mxu0 0.0
    %1651 = vmatpush1.msra.mxu0 %v248
    %1652 = vmatprep.subr.mxu0 0.0
    %1653 = vmatpush1.msra.mxu0 %v253
    %1654 = vmatprep.subr.mxu0 0.0
    %1655 = vmatpush1.msra.mxu0 %v258
    %1656 = vmatprep.subr.mxu0 0.0
    %1657 = vmatpush1.msra.mxu0 %v263
    %1658 = vmatprep.subr.mxu0 0.0
    %1659 = vmatpush1.msra.mxu0 %v268
    %1660 = vmatprep.subr.mxu0 0.0
    %1661 = vmatpush1.msra.mxu0 %v273
    %1662 = vmatprep.subr.mxu0 0.0
    %1663 = vmatpush1.msra.mxu0 %v278
    %1664 = vmatprep.subr.mxu0 0.0
    %1665 = vmatpush1.msra.mxu0 %v283
    %1666 = vmatprep.subr.mxu0 0.0
    %1667 = vmatpush1.msra.mxu0 %v288
    %1668 = vmatprep.subr.mxu0 0.0
    %1669 = vmatpush1.msra.mxu0 %v293
    %1670 = vmatprep.subr.mxu0 0.0
    %1671 = vmatpush1.msra.mxu0 %v298
    %1672 = vmatprep.subr.mxu0 0.0
    %1673 = vmatpush1.msra.mxu0 %v303
    %1674 = vmatprep.subr.mxu0 0.0
    %1675 = vmatpush1.msra.mxu0 %v308
    %1676 = vmatprep.subr.mxu0 0.0
    %1677 = vmatpush1.msra.mxu0 %v313
    %1678 = vmatprep.subr.mxu0 0.0
    %1679 = vmatpush1.msra.mxu0 %v318
    %1680 = vmatprep.subr.mxu0 0.0
    %1681 = vmatpush1.msra.mxu0 %v323
    %1682 = vmatprep.subr.mxu0 0.0
    %1683 = vmatpush1.msra.mxu0 %v328
    %1684 = vmatprep.subr.mxu0 0.0
    %1685 = vmatpush1.msra.mxu0 %v333
    %1686 = vmatprep.subr.mxu0 0.0
    %1687 = vmatpush1.msra.mxu0 %v338
    %1688 = vmatprep.subr.mxu0 0.0
    %1689 = vmatpush1.msra.mxu0 %v343
    %1690 = vmatprep.subr.mxu0 0.0
    %1691 = vmatpush1.msra.mxu0 0.0
    %1692 = vmatprep.subr.mxu0 0.0
    %1693 = vmatpush1.msra.mxu0 0.0
    %1694 = vmatprep.subr.mxu0 0.0
    %1695 = vmatpush1.msra.mxu0 0.0
    %1696 = vmatprep.subr.mxu0 0.0
    %1697 = vmatpush1.msra.mxu0 0.0
    %1698 = vmatprep.subr.mxu0 0.0
    %1699 = vmatpush1.msra.mxu0 0.0
    %1700 = vmatprep.subr.mxu0 0.0
    %1701 = vmatpush1.msra.mxu0 0.0
    %1702 = vmatprep.subr.mxu0 0.0
    %1703 = vmatpush1.msra.mxu0 0.0
    %1704 = vmatprep.subr.mxu0 0.0
    %1705 = vmatpush1.msra.mxu0 0.0
    %1706 = vmatprep.subr.mxu0 0.0
    %1707 = vmatpush1.msra.mxu0 0.0
    %1708 = vmatprep.subr.mxu0 0.0
    %1709 = vmatpush1.msra.mxu0 0.0
    %1710 = vmatprep.subr.mxu0 0.0
    %1711 = vmatpush1.msra.mxu0 0.0
    %1712 = vmatprep.subr.mxu0 0.0
    %1713 = vmatpush1.msra.mxu0 0.0
    %1714 = vmatprep.mubr.f32.mxu0 %v1506
    %1715 = vmatmul.mubr.f32.gmra.mrb[0].mxu0 %v1503
    %v1716 = vpop.f32.mrb[0].mxu0
    %v1717 = vadd.f32 0.0, %v1716
    %v1718 = vpop.f32.mrb[0].mxu0
    %1719 = vdwg.mxu0
    %v1724 = vrot.slane %v1575, 3
    %v1725 = vrot.slane %v1577, 3
    %v1726 = vrot.slane %v1646, 3
    %v1727 = vrot.slane %v1648, 3
    %v1732 = vadd.f32 %v144, %v1724
    %v1733 = vadd.f32 %v146, %v1725
    %v1734 = vadd.f32 %v215, %v1726
    %v1735 = vadd.f32 %v217, %v1727
    %v1736 = vadd.f32 %v1717, %v219
    %v1737 = vxor.u32 %v1732, 2147483648
    %v1738 = vxor.u32 %v1733, 2147483648
    %v1739 = vxor.u32 %v1734, 2147483648
    %v1740 = vmul.f32 %v1737, 1.442695
    %v1741 = vpow.pop %v1740
    %v1742 = vmul.f32 %v1738, 1.442695
    %v1743 = vpow.pop %v1742
    %v1744 = vmul.f32 %v1739, 1.442695
    %v1745 = vpow.pop %v1744
    %v1746 = vadd.f32 %v1741, 1.0
    %v1747 = vadd.f32 %v1743, 1.0
    %v1748 = vadd.f32 %v1745, 1.0
    %v1749 = vrcp.pop %v1746
    %v1750 = vmul.f32 1.0, %v1749
    %v1751 = vrcp.pop %v1747
    %v1752 = vmul.f32 1.0, %v1751
    %v1753 = vrcp.pop %v1748
    %v1754 = vmul.f32 1.0, %v1753
    %v1755 = vtanh.pop %v1735
    %v1757 = vrot.slane %v1471, 7
    %v1759 = vmul.f32 %v1752, %v1757
    %v1760 = vmul.f32 %v1750, %v1755
    %v1761 = vadd.f32 %v1759, %v1760
    %v1762 = vtanh.pop %v1761
    %v1763 = vmul.f32 %v1754, %v1762
    %v1764 = vxor.u32 %v1736, 2147483648
    %v1765 = vmul.f32 %v1764, 1.442695
    %v1766 = vpow.pop %v1765
    %v1767 = vadd.f32 %v1766, 1.0
    %v1768 = vrcp.pop %v1767
    %v1769 = vmul.f32 1.0, %v1768
    %v1770 = vtanh.pop %v1736
    %v1771 = vmul.f32 %v1769, %v1491
    %1773 = vrot.lane.b32.xlu0 %v1770, 32
    %v1774 = vpop.permute.xlu0 %1773
    %v1776 = vmul.f32 %v1769, %v1774
    %1778 = vrot.lane.b32.xlu0 %v1776, 32
    %v1779 = vpop.permute.xlu0 %1778
    %v1781 = vadd.f32 %v1771, %v1779
    %v1782 = vtanh.pop %v1781
    %1784 = vrot.lane.b32.xlu0 %v1782, 32
    %v1785 = vpop.permute.xlu0 %1784
    %v1787 = vmul.f32 %v1769, %v1785
    %v1789 = vrot.slane %v1787, 3
    %1790 = vrot.lane.b32.xlu0 %v1789, 64
    %v1791 = vpop.permute.xlu0 %1790
    %v1793 = vrot.slane %v1763, 5
    %v1794 = vrot.slane %v1791, 5
    %v1796 = vsel %vm344, %v1794, 0
    %1798 = vmatprep.subr.mxu0 %v245
    %1799 = vmatpush1.msra.mxu0 %v244
    %1800 = vmatprep.subr.mxu0 %v250
    %1801 = vmatpush1.msra.mxu0 %v249
    %1802 = vmatprep.subr.mxu0 %v255
    %1803 = vmatpush1.msra.mxu0 %v254
    %1804 = vmatprep.subr.mxu0 %v260
    %1805 = vmatpush1.msra.mxu0 %v259
    %1806 = vmatprep.subr.mxu0 %v265
    %1807 = vmatpush1.msra.mxu0 %v264
    %1808 = vmatprep.subr.mxu0 %v270
    %1809 = vmatpush1.msra.mxu0 %v269
    %1810 = vmatprep.subr.mxu0 %v275
    %1811 = vmatpush1.msra.mxu0 %v274
    %1812 = vmatprep.subr.mxu0 %v280
    %1813 = vmatpush1.msra.mxu0 %v279
    %1814 = vmatprep.subr.mxu0 %v285
    %1815 = vmatpush1.msra.mxu0 %v284
    %1816 = vmatprep.subr.mxu0 %v290
    %1817 = vmatpush1.msra.mxu0 %v289
    %1818 = vmatprep.subr.mxu0 %v295
    %1819 = vmatpush1.msra.mxu0 %v294
    %1820 = vmatprep.subr.mxu0 %v300
    %1821 = vmatpush1.msra.mxu0 %v299
    %1822 = vmatprep.subr.mxu0 %v305
    %1823 = vmatpush1.msra.mxu0 %v304
    %1824 = vmatprep.subr.mxu0 %v310
    %1825 = vmatpush1.msra.mxu0 %v309
    %1826 = vmatprep.subr.mxu0 %v315
    %1827 = vmatpush1.msra.mxu0 %v314
    %1828 = vmatprep.subr.mxu0 %v320
    %1829 = vmatpush1.msra.mxu0 %v319
    %1830 = vmatprep.subr.mxu0 %v325
    %1831 = vmatpush1.msra.mxu0 %v324
    %1832 = vmatprep.subr.mxu0 %v330
    %1833 = vmatpush1.msra.mxu0 %v329
    %1834 = vmatprep.subr.mxu0 %v335
    %1835 = vmatpush1.msra.mxu0 %v334
    %1836 = vmatprep.subr.mxu0 %v340
    %1837 = vmatpush1.msra.mxu0 %v339
    %1838 = vmatprep.subr.mxu0 0.0
    %1839 = vmatpush1.msra.mxu0 0.0
    %1840 = vmatprep.subr.mxu0 0.0
    %1841 = vmatpush1.msra.mxu0 0.0
    %1842 = vmatprep.subr.mxu0 0.0
    %1843 = vmatpush1.msra.mxu0 0.0
    %1844 = vmatprep.subr.mxu0 0.0
    %1845 = vmatpush1.msra.mxu0 0.0
    %1846 = vmatprep.subr.mxu0 0.0
    %1847 = vmatpush1.msra.mxu0 0.0
    %1848 = vmatprep.subr.mxu0 0.0
    %1849 = vmatpush1.msra.mxu0 0.0
    %1850 = vmatprep.subr.mxu0 0.0
    %1851 = vmatpush1.msra.mxu0 0.0
    %1852 = vmatprep.subr.mxu0 0.0
    %1853 = vmatpush1.msra.mxu0 0.0
    %1854 = vmatprep.subr.mxu0 0.0
    %1855 = vmatpush1.msra.mxu0 0.0
    %1856 = vmatprep.subr.mxu0 0.0
    %1857 = vmatpush1.msra.mxu0 0.0
    %1858 = vmatprep.subr.mxu0 0.0
    %1859 = vmatpush1.msra.mxu0 0.0
    %1860 = vmatprep.subr.mxu0 0.0
    %1861 = vmatpush1.msra.mxu0 0.0
    %1862 = vmatprep.mubr.f32.mxu0 %v1796
    %1863 = vmatmul.mubr.f32.gmra.mrb[0].mxu0 %v1793
    %v1864 = vpop.f32.mrb[0].mxu0
    %v1865 = vadd.f32 0.0, %v1864
    %v1866 = vpop.f32.mrb[0].mxu0
    %v1867 = vadd.f32 0.0, %v1866
    %1868 = vdwg.mxu0
    %1869 = vmatprep.subr.mxu0 %v247
    %1870 = vmatpush1.msra.mxu0 %v246
    %1871 = vmatprep.subr.mxu0 %v252
    %1872 = vmatpush1.msra.mxu0 %v251
    %1873 = vmatprep.subr.mxu0 %v257
    %1874 = vmatpush1.msra.mxu0 %v256
    %1875 = vmatprep.subr.mxu0 %v262
    %1876 = vmatpush1.msra.mxu0 %v261
    %1877 = vmatprep.subr.mxu0 %v267
    %1878 = vmatpush1.msra.mxu0 %v266
    %1879 = vmatprep.subr.mxu0 %v272
    %1880 = vmatpush1.msra.mxu0 %v271
    %1881 = vmatprep.subr.mxu0 %v277
    %1882 = vmatpush1.msra.mxu0 %v276
    %1883 = vmatprep.subr.mxu0 %v282
    %1884 = vmatpush1.msra.mxu0 %v281
    %1885 = vmatprep.subr.mxu0 %v287
    %1886 = vmatpush1.msra.mxu0 %v286
    %1887 = vmatprep.subr.mxu0 %v292
    %1888 = vmatpush1.msra.mxu0 %v291
    %1889 = vmatprep.subr.mxu0 %v297
    %1890 = vmatpush1.msra.mxu0 %v296
    %1891 = vmatprep.subr.mxu0 %v302
    %1892 = vmatpush1.msra.mxu0 %v301
    %1893 = vmatprep.subr.mxu0 %v307
    %1894 = vmatpush1.msra.mxu0 %v306
    %1895 = vmatprep.subr.mxu0 %v312
    %1896 = vmatpush1.msra.mxu0 %v311
    %1897 = vmatprep.subr.mxu0 %v317
    %1898 = vmatpush1.msra.mxu0 %v316
    %1899 = vmatprep.subr.mxu0 %v322
    %1900 = vmatpush1.msra.mxu0 %v321
    %1901 = vmatprep.subr.mxu0 %v327
    %1902 = vmatpush1.msra.mxu0 %v326
    %1903 = vmatprep.subr.mxu0 %v332
    %1904 = vmatpush1.msra.mxu0 %v331
    %1905 = vmatprep.subr.mxu0 %v337
    %1906 = vmatpush1.msra.mxu0 %v336
    %1907 = vmatprep.subr.mxu0 %v342
    %1908 = vmatpush1.msra.mxu0 %v341
    %1909 = vmatprep.subr.mxu0 0.0
    %1910 = vmatpush1.msra.mxu0 0.0
    %1911 = vmatprep.subr.mxu0 0.0
    %1912 = vmatpush1.msra.mxu0 0.0
    %1913 = vmatprep.subr.mxu0 0.0
    %1914 = vmatpush1.msra.mxu0 0.0
    %1915 = vmatprep.subr.mxu0 0.0
    %1916 = vmatpush1.msra.mxu0 0.0
    %1917 = vmatprep.subr.mxu0 0.0
    %1918 = vmatpush1.msra.mxu0 0.0
    %1919 = vmatprep.subr.mxu0 0.0
    %1920 = vmatpush1.msra.mxu0 0.0
    %1921 = vmatprep.subr.mxu0 0.0
    %1922 = vmatpush1.msra.mxu0 0.0
    %1923 = vmatprep.subr.mxu0 0.0
    %1924 = vmatpush1.msra.mxu0 0.0
    %1925 = vmatprep.subr.mxu0 0.0
    %1926 = vmatpush1.msra.mxu0 0.0
    %1927 = vmatprep.subr.mxu0 0.0
    %1928 = vmatpush1.msra.mxu0 0.0
    %1929 = vmatprep.subr.mxu0 0.0
    %1930 = vmatpush1.msra.mxu0 0.0
    %1931 = vmatprep.subr.mxu0 0.0
    %1932 = vmatpush1.msra.mxu0 0.0
    %1933 = vmatprep.mubr.f32.mxu0 %v1796
    %1934 = vmatmul.mubr.f32.gmra.mrb[0].mxu0 %v1793
    %v1935 = vpop.f32.mrb[0].mxu0
    %v1936 = vadd.f32 0.0, %v1935
    %v1937 = vpop.f32.mrb[0].mxu0
    %v1938 = vadd.f32 0.0, %v1937
    %1939 = vdwg.mxu0
    %1940 = vmatprep.subr.mxu0 0.0
    %1941 = vmatpush1.msra.mxu0 %v248
    %1942 = vmatprep.subr.mxu0 0.0
    %1943 = vmatpush1.msra.mxu0 %v253
    %1944 = vmatprep.subr.mxu0 0.0
    %1945 = vmatpush1.msra.mxu0 %v258
    %1946 = vmatprep.subr.mxu0 0.0
    %1947 = vmatpush1.msra.mxu0 %v263
    %1948 = vmatprep.subr.mxu0 0.0
    %1949 = vmatpush1.msra.mxu0 %v268
    %1950 = vmatprep.subr.mxu0 0.0
    %1951 = vmatpush1.msra.mxu0 %v273
    %1952 = vmatprep.subr.mxu0 0.0
    %1953 = vmatpush1.msra.mxu0 %v278
    %1954 = vmatprep.subr.mxu0 0.0
    %1955 = vmatpush1.msra.mxu0 %v283
    %1956 = vmatprep.subr.mxu0 0.0
    %1957 = vmatpush1.msra.mxu0 %v288
    %1958 = vmatprep.subr.mxu0 0.0
    %1959 = vmatpush1.msra.mxu0 %v293
    %1960 = vmatprep.subr.mxu0 0.0
    %1961 = vmatpush1.msra.mxu0 %v298
    %1962 = vmatprep.subr.mxu0 0.0
    %1963 = vmatpush1.msra.mxu0 %v303
    %1964 = vmatprep.subr.mxu0 0.0
    %1965 = vmatpush1.msra.mxu0 %v308
    %1966 = vmatprep.subr.mxu0 0.0
    %1967 = vmatpush1.msra.mxu0 %v313
    %1968 = vmatprep.subr.mxu0 0.0
    %1969 = vmatpush1.msra.mxu0 %v318
    %1970 = vmatprep.subr.mxu0 0.0
    %1971 = vmatpush1.msra.mxu0 %v323
    %1972 = vmatprep.subr.mxu0 0.0
    %1973 = vmatpush1.msra.mxu0 %v328
    %1974 = vmatprep.subr.mxu0 0.0
    %1975 = vmatpush1.msra.mxu0 %v333
    %1976 = vmatprep.subr.mxu0 0.0
    %1977 = vmatpush1.msra.mxu0 %v338
    %1978 = vmatprep.subr.mxu0 0.0
    %1979 = vmatpush1.msra.mxu0 %v343
    %1980 = vmatprep.subr.mxu0 0.0
    %1981 = vmatpush1.msra.mxu0 0.0
    %1982 = vmatprep.subr.mxu0 0.0
    %1983 = vmatpush1.msra.mxu0 0.0
    %1984 = vmatprep.subr.mxu0 0.0
    %1985 = vmatpush1.msra.mxu0 0.0
    %1986 = vmatprep.subr.mxu0 0.0
    %1987 = vmatpush1.msra.mxu0 0.0
    %1988 = vmatprep.subr.mxu0 0.0
    %1989 = vmatpush1.msra.mxu0 0.0
    %1990 = vmatprep.subr.mxu0 0.0
    %1991 = vmatpush1.msra.mxu0 0.0
    %1992 = vmatprep.subr.mxu0 0.0
    %1993 = vmatpush1.msra.mxu0 0.0
    %1994 = vmatprep.subr.mxu0 0.0
    %1995 = vmatpush1.msra.mxu0 0.0
    %1996 = vmatprep.subr.mxu0 0.0
    %1997 = vmatpush1.msra.mxu0 0.0
    %1998 = vmatprep.subr.mxu0 0.0
    %1999 = vmatpush1.msra.mxu0 0.0
    %2000 = vmatprep.subr.mxu0 0.0
    %2001 = vmatpush1.msra.mxu0 0.0
    %2002 = vmatprep.subr.mxu0 0.0
    %2003 = vmatpush1.msra.mxu0 0.0
    %2004 = vmatprep.mubr.f32.mxu0 %v1796
    %2005 = vmatmul.mubr.f32.gmra.mrb[0].mxu0 %v1793
    %v2006 = vpop.f32.mrb[0].mxu0
    %v2007 = vadd.f32 0.0, %v2006
    %v2008 = vpop.f32.mrb[0].mxu0
    %2009 = vdwg.mxu0
    %v2014 = vrot.slane %v1865, 2
    %v2015 = vrot.slane %v1867, 2
    %v2016 = vrot.slane %v1936, 2
    %v2017 = vrot.slane %v1938, 2
    %v2022 = vadd.f32 %v144, %v2014
    %v2023 = vadd.f32 %v146, %v2015
    %v2024 = vadd.f32 %v215, %v2016
    %v2025 = vadd.f32 %v217, %v2017
    %v2026 = vadd.f32 %v2007, %v219
    %v2027 = vxor.u32 %v2022, 2147483648
    %v2028 = vxor.u32 %v2023, 2147483648
    %v2029 = vxor.u32 %v2024, 2147483648
    %v2030 = vmul.f32 %v2027, 1.442695
    %v2031 = vpow.pop %v2030
    %v2032 = vmul.f32 %v2028, 1.442695
    %v2033 = vpow.pop %v2032
    %v2034 = vmul.f32 %v2029, 1.442695
    %v2035 = vpow.pop %v2034
    %v2036 = vadd.f32 %v2031, 1.0
    %v2037 = vadd.f32 %v2033, 1.0
    %v2038 = vadd.f32 %v2035, 1.0
    %v2039 = vrcp.pop %v2036
    %v2040 = vmul.f32 1.0, %v2039
    %v2041 = vrcp.pop %v2037
    %v2042 = vmul.f32 1.0, %v2041
    %v2043 = vrcp.pop %v2038
    %v2044 = vmul.f32 1.0, %v2043
    %v2045 = vtanh.pop %v2025
    %v2047 = vrot.slane %v1761, 7
    %v2049 = vmul.f32 %v2042, %v2047
    %v2050 = vmul.f32 %v2040, %v2045
    %v2051 = vadd.f32 %v2049, %v2050
    %v2052 = vtanh.pop %v2051
    %v2053 = vmul.f32 %v2044, %v2052
    %v2054 = vxor.u32 %v2026, 2147483648
    %v2055 = vmul.f32 %v2054, 1.442695
    %v2056 = vpow.pop %v2055
    %v2057 = vadd.f32 %v2056, 1.0
    %v2058 = vrcp.pop %v2057
    %v2059 = vmul.f32 1.0, %v2058
    %v2060 = vtanh.pop %v2026
    %v2061 = vmul.f32 %v2059, %v1781
    %2063 = vrot.lane.b32.xlu0 %v2060, 32
    %v2064 = vpop.permute.xlu0 %2063
    %v2066 = vmul.f32 %v2059, %v2064
    %2068 = vrot.lane.b32.xlu0 %v2066, 32
    %v2069 = vpop.permute.xlu0 %2068
    %v2071 = vadd.f32 %v2061, %v2069
    %v2072 = vtanh.pop %v2071
    %2074 = vrot.lane.b32.xlu0 %v2072, 32
    %v2075 = vpop.permute.xlu0 %2074
    %v2077 = vmul.f32 %v2059, %v2075
    %v2079 = vrot.slane %v2077, 2
    %2080 = vrot.lane.b32.xlu0 %v2079, 64
    %v2081 = vpop.permute.xlu0 %2080
    %v2083 = vrot.slane %v2053, 6
    %v2084 = vrot.slane %v2081, 6
    %v2086 = vsel %vm344, %v2084, 0
    %2088 = vmatprep.subr.mxu0 %v245
    %2089 = vmatpush1.msra.mxu0 %v244
    %2090 = vmatprep.subr.mxu0 %v250
    %2091 = vmatpush1.msra.mxu0 %v249
    %2092 = vmatprep.subr.mxu0 %v255
    %2093 = vmatpush1.msra.mxu0 %v254
    %2094 = vmatprep.subr.mxu0 %v260
    %2095 = vmatpush1.msra.mxu0 %v259
    %2096 = vmatprep.subr.mxu0 %v265
    %2097 = vmatpush1.msra.mxu0 %v264
    %2098 = vmatprep.subr.mxu0 %v270
    %2099 = vmatpush1.msra.mxu0 %v269
    %2100 = vmatprep.subr.mxu0 %v275
    %2101 = vmatpush1.msra.mxu0 %v274
    %2102 = vmatprep.subr.mxu0 %v280
    %2103 = vmatpush1.msra.mxu0 %v279
    %2104 = vmatprep.subr.mxu0 %v285
    %2105 = vmatpush1.msra.mxu0 %v284
    %2106 = vmatprep.subr.mxu0 %v290
    %2107 = vmatpush1.msra.mxu0 %v289
    %2108 = vmatprep.subr.mxu0 %v295
    %2109 = vmatpush1.msra.mxu0 %v294
    %2110 = vmatprep.subr.mxu0 %v300
    %2111 = vmatpush1.msra.mxu0 %v299
    %2112 = vmatprep.subr.mxu0 %v305
    %2113 = vmatpush1.msra.mxu0 %v304
    %2114 = vmatprep.subr.mxu0 %v310
    %2115 = vmatpush1.msra.mxu0 %v309
    %2116 = vmatprep.subr.mxu0 %v315
    %2117 = vmatpush1.msra.mxu0 %v314
    %2118 = vmatprep.subr.mxu0 %v320
    %2119 = vmatpush1.msra.mxu0 %v319
    %2120 = vmatprep.subr.mxu0 %v325
    %2121 = vmatpush1.msra.mxu0 %v324
    %2122 = vmatprep.subr.mxu0 %v330
    %2123 = vmatpush1.msra.mxu0 %v329
    %2124 = vmatprep.subr.mxu0 %v335
    %2125 = vmatpush1.msra.mxu0 %v334
    %2126 = vmatprep.subr.mxu0 %v340
    %2127 = vmatpush1.msra.mxu0 %v339
    %2128 = vmatprep.subr.mxu0 0.0
    %2129 = vmatpush1.msra.mxu0 0.0
    %2130 = vmatprep.subr.mxu0 0.0
    %2131 = vmatpush1.msra.mxu0 0.0
    %2132 = vmatprep.subr.mxu0 0.0
    %2133 = vmatpush1.msra.mxu0 0.0
    %2134 = vmatprep.subr.mxu0 0.0
    %2135 = vmatpush1.msra.mxu0 0.0
    %2136 = vmatprep.subr.mxu0 0.0
    %2137 = vmatpush1.msra.mxu0 0.0
    %2138 = vmatprep.subr.mxu0 0.0
    %2139 = vmatpush1.msra.mxu0 0.0
    %2140 = vmatprep.subr.mxu0 0.0
    %2141 = vmatpush1.msra.mxu0 0.0
    %2142 = vmatprep.subr.mxu0 0.0
    %2143 = vmatpush1.msra.mxu0 0.0
    %2144 = vmatprep.subr.mxu0 0.0
    %2145 = vmatpush1.msra.mxu0 0.0
    %2146 = vmatprep.subr.mxu0 0.0
    %2147 = vmatpush1.msra.mxu0 0.0
    %2148 = vmatprep.subr.mxu0 0.0
    %2149 = vmatpush1.msra.mxu0 0.0
    %2150 = vmatprep.subr.mxu0 0.0
    %2151 = vmatpush1.msra.mxu0 0.0
    %2152 = vmatprep.mubr.f32.mxu0 %v2086
    %2153 = vmatmul.mubr.f32.gmra.mrb[0].mxu0 %v2083
    %v2154 = vpop.f32.mrb[0].mxu0
    %v2155 = vadd.f32 0.0, %v2154
    %v2156 = vpop.f32.mrb[0].mxu0
    %v2157 = vadd.f32 0.0, %v2156
    %2158 = vdwg.mxu0
    %2159 = vmatprep.subr.mxu0 %v247
    %2160 = vmatpush1.msra.mxu0 %v246
    %2161 = vmatprep.subr.mxu0 %v252
    %2162 = vmatpush1.msra.mxu0 %v251
    %2163 = vmatprep.subr.mxu0 %v257
    %2164 = vmatpush1.msra.mxu0 %v256
    %2165 = vmatprep.subr.mxu0 %v262
    %2166 = vmatpush1.msra.mxu0 %v261
    %2167 = vmatprep.subr.mxu0 %v267
    %2168 = vmatpush1.msra.mxu0 %v266
    %2169 = vmatprep.subr.mxu0 %v272
    %2170 = vmatpush1.msra.mxu0 %v271
    %2171 = vmatprep.subr.mxu0 %v277
    %2172 = vmatpush1.msra.mxu0 %v276
    %2173 = vmatprep.subr.mxu0 %v282
    %2174 = vmatpush1.msra.mxu0 %v281
    %2175 = vmatprep.subr.mxu0 %v287
    %2176 = vmatpush1.msra.mxu0 %v286
    %2177 = vmatprep.subr.mxu0 %v292
    %2178 = vmatpush1.msra.mxu0 %v291
    %2179 = vmatprep.subr.mxu0 %v297
    %2180 = vmatpush1.msra.mxu0 %v296
    %2181 = vmatprep.subr.mxu0 %v302
    %2182 = vmatpush1.msra.mxu0 %v301
    %2183 = vmatprep.subr.mxu0 %v307
    %2184 = vmatpush1.msra.mxu0 %v306
    %2185 = vmatprep.subr.mxu0 %v312
    %2186 = vmatpush1.msra.mxu0 %v311
    %2187 = vmatprep.subr.mxu0 %v317
    %2188 = vmatpush1.msra.mxu0 %v316
    %2189 = vmatprep.subr.mxu0 %v322
    %2190 = vmatpush1.msra.mxu0 %v321
    %2191 = vmatprep.subr.mxu0 %v327
    %2192 = vmatpush1.msra.mxu0 %v326
    %2193 = vmatprep.subr.mxu0 %v332
    %2194 = vmatpush1.msra.mxu0 %v331
    %2195 = vmatprep.subr.mxu0 %v337
    %2196 = vmatpush1.msra.mxu0 %v336
    %2197 = vmatprep.subr.mxu0 %v342
    %2198 = vmatpush1.msra.mxu0 %v341
    %2199 = vmatprep.subr.mxu0 0.0
    %2200 = vmatpush1.msra.mxu0 0.0
    %2201 = vmatprep.subr.mxu0 0.0
    %2202 = vmatpush1.msra.mxu0 0.0
    %2203 = vmatprep.subr.mxu0 0.0
    %2204 = vmatpush1.msra.mxu0 0.0
    %2205 = vmatprep.subr.mxu0 0.0
    %2206 = vmatpush1.msra.mxu0 0.0
    %2207 = vmatprep.subr.mxu0 0.0
    %2208 = vmatpush1.msra.mxu0 0.0
    %2209 = vmatprep.subr.mxu0 0.0
    %2210 = vmatpush1.msra.mxu0 0.0
    %2211 = vmatprep.subr.mxu0 0.0
    %2212 = vmatpush1.msra.mxu0 0.0
    %2213 = vmatprep.subr.mxu0 0.0
    %2214 = vmatpush1.msra.mxu0 0.0
    %2215 = vmatprep.subr.mxu0 0.0
    %2216 = vmatpush1.msra.mxu0 0.0
    %2217 = vmatprep.subr.mxu0 0.0
    %2218 = vmatpush1.msra.mxu0 0.0
    %2219 = vmatprep.subr.mxu0 0.0
    %2220 = vmatpush1.msra.mxu0 0.0
    %2221 = vmatprep.subr.mxu0 0.0
    %2222 = vmatpush1.msra.mxu0 0.0
    %2223 = vmatprep.mubr.f32.mxu0 %v2086
    %2224 = vmatmul.mubr.f32.gmra.mrb[0].mxu0 %v2083
    %v2225 = vpop.f32.mrb[0].mxu0
    %v2226 = vadd.f32 0.0, %v2225
    %v2227 = vpop.f32.mrb[0].mxu0
    %v2228 = vadd.f32 0.0, %v2227
    %2229 = vdwg.mxu0
    %2230 = vmatprep.subr.mxu0 0.0
    %2231 = vmatpush1.msra.mxu0 %v248
    %2232 = vmatprep.subr.mxu0 0.0
    %2233 = vmatpush1.msra.mxu0 %v253
    %2234 = vmatprep.subr.mxu0 0.0
    %2235 = vmatpush1.msra.mxu0 %v258
    %2236 = vmatprep.subr.mxu0 0.0
    %2237 = vmatpush1.msra.mxu0 %v263
    %2238 = vmatprep.subr.mxu0 0.0
    %2239 = vmatpush1.msra.mxu0 %v268
    %2240 = vmatprep.subr.mxu0 0.0
    %2241 = vmatpush1.msra.mxu0 %v273
    %2242 = vmatprep.subr.mxu0 0.0
    %2243 = vmatpush1.msra.mxu0 %v278
    %2244 = vmatprep.subr.mxu0 0.0
    %2245 = vmatpush1.msra.mxu0 %v283
    %2246 = vmatprep.subr.mxu0 0.0
    %2247 = vmatpush1.msra.mxu0 %v288
    %2248 = vmatprep.subr.mxu0 0.0
    %2249 = vmatpush1.msra.mxu0 %v293
    %2250 = vmatprep.subr.mxu0 0.0
    %2251 = vmatpush1.msra.mxu0 %v298
    %2252 = vmatprep.subr.mxu0 0.0
    %2253 = vmatpush1.msra.mxu0 %v303
    %2254 = vmatprep.subr.mxu0 0.0
    %2255 = vmatpush1.msra.mxu0 %v308
    %2256 = vmatprep.subr.mxu0 0.0
    %2257 = vmatpush1.msra.mxu0 %v313
    %2258 = vmatprep.subr.mxu0 0.0
    %2259 = vmatpush1.msra.mxu0 %v318
    %2260 = vmatprep.subr.mxu0 0.0
    %2261 = vmatpush1.msra.mxu0 %v323
    %2262 = vmatprep.subr.mxu0 0.0
    %2263 = vmatpush1.msra.mxu0 %v328
    %2264 = vmatprep.subr.mxu0 0.0
    %2265 = vmatpush1.msra.mxu0 %v333
    %2266 = vmatprep.subr.mxu0 0.0
    %2267 = vmatpush1.msra.mxu0 %v338
    %2268 = vmatprep.subr.mxu0 0.0
    %2269 = vmatpush1.msra.mxu0 %v343
    %2270 = vmatprep.subr.mxu0 0.0
    %2271 = vmatpush1.msra.mxu0 0.0
    %2272 = vmatprep.subr.mxu0 0.0
    %2273 = vmatpush1.msra.mxu0 0.0
    %2274 = vmatprep.subr.mxu0 0.0
    %2275 = vmatpush1.msra.mxu0 0.0
    %2276 = vmatprep.subr.mxu0 0.0
    %2277 = vmatpush1.msra.mxu0 0.0
    %2278 = vmatprep.subr.mxu0 0.0
    %2279 = vmatpush1.msra.mxu0 0.0
    %2280 = vmatprep.subr.mxu0 0.0
    %2281 = vmatpush1.msra.mxu0 0.0
    %2282 = vmatprep.subr.mxu0 0.0
    %2283 = vmatpush1.msra.mxu0 0.0
    %2284 = vmatprep.subr.mxu0 0.0
    %2285 = vmatpush1.msra.mxu0 0.0
    %2286 = vmatprep.subr.mxu0 0.0
    %2287 = vmatpush1.msra.mxu0 0.0
    %2288 = vmatprep.subr.mxu0 0.0
    %2289 = vmatpush1.msra.mxu0 0.0
    %2290 = vmatprep.subr.mxu0 0.0
    %2291 = vmatpush1.msra.mxu0 0.0
    %2292 = vmatprep.subr.mxu0 0.0
    %2293 = vmatpush1.msra.mxu0 0.0
    %2294 = vmatprep.mubr.f32.mxu0 %v2086
    %2295 = vmatmul.mubr.f32.gmra.mrb[0].mxu0 %v2083
    %v2296 = vpop.f32.mrb[0].mxu0
    %v2297 = vadd.f32 0.0, %v2296
    %v2298 = vpop.f32.mrb[0].mxu0
    %2299 = vdwg.mxu0
    %v2304 = vrot.slane %v2155, 1
    %v2305 = vrot.slane %v2157, 1
    %v2306 = vrot.slane %v2226, 1
    %v2307 = vrot.slane %v2228, 1
    %v2312 = vadd.f32 %v144, %v2304
    %v2313 = vadd.f32 %v146, %v2305
    %v2314 = vadd.f32 %v215, %v2306
    %v2315 = vadd.f32 %v217, %v2307
    %v2316 = vadd.f32 %v2297, %v219
    %v2317 = vxor.u32 %v2312, 2147483648
    %v2318 = vxor.u32 %v2313, 2147483648
    %v2319 = vxor.u32 %v2314, 2147483648
    %v2320 = vmul.f32 %v2317, 1.442695
    %v2321 = vpow.pop %v2320
    %v2322 = vmul.f32 %v2318, 1.442695
    %v2323 = vpow.pop %v2322
    %v2324 = vmul.f32 %v2319, 1.442695
    %v2325 = vpow.pop %v2324
    %v2326 = vadd.f32 %v2321, 1.0
    %v2327 = vadd.f32 %v2323, 1.0
    %v2328 = vadd.f32 %v2325, 1.0
    %v2329 = vrcp.pop %v2326
    %v2330 = vmul.f32 1.0, %v2329
    %v2331 = vrcp.pop %v2327
    %v2332 = vmul.f32 1.0, %v2331
    %v2333 = vrcp.pop %v2328
    %v2334 = vmul.f32 1.0, %v2333
    %v2335 = vtanh.pop %v2315
    %v2337 = vrot.slane %v2051, 7
    %v2339 = vmul.f32 %v2332, %v2337
    %v2340 = vmul.f32 %v2330, %v2335
    %v2341 = vadd.f32 %v2339, %v2340
    %v2342 = vtanh.pop %v2341
    %v2343 = vmul.f32 %v2334, %v2342
    %v2344 = vxor.u32 %v2316, 2147483648
    %v2345 = vmul.f32 %v2344, 1.442695
    %v2346 = vpow.pop %v2345
    %v2347 = vadd.f32 %v2346, 1.0
    %v2348 = vrcp.pop %v2347
    %v2349 = vmul.f32 1.0, %v2348
    %v2350 = vtanh.pop %v2316
    %v2351 = vmul.f32 %v2349, %v2071
    %2353 = vrot.lane.b32.xlu0 %v2350, 32
    %v2354 = vpop.permute.xlu0 %2353
    %v2356 = vmul.f32 %v2349, %v2354
    %2358 = vrot.lane.b32.xlu0 %v2356, 32
    %v2359 = vpop.permute.xlu0 %2358
    %v2361 = vadd.f32 %v2351, %v2359
    %v2362 = vtanh.pop %v2361
    %2364 = vrot.lane.b32.xlu0 %v2362, 32
    %v2365 = vpop.permute.xlu0 %2364
    %v2367 = vmul.f32 %v2349, %v2365
    %v2369 = vrot.slane %v2367, 1
    %2370 = vrot.lane.b32.xlu0 %v2369, 64
    %v2371 = vpop.permute.xlu0 %2370
    %v2373 = vrot.slane %v2343, 7
    %v2374 = vrot.slane %v2371, 7
    %v2376 = vsel %vm344, %v2374, 0
    %2378 = vmatprep.subr.mxu0 0.0
    %2379 = vmatpush1.msra.mxu0 %v248
    %2380 = vmatprep.subr.mxu0 0.0
    %2381 = vmatpush1.msra.mxu0 %v253
    %2382 = vmatprep.subr.mxu0 0.0
    %2383 = vmatpush1.msra.mxu0 %v258
    %2384 = vmatprep.subr.mxu0 0.0
    %2385 = vmatpush1.msra.mxu0 %v263
    %2386 = vmatprep.subr.mxu0 0.0
    %2387 = vmatpush1.msra.mxu0 %v268
    %2388 = vmatprep.subr.mxu0 0.0
    %2389 = vmatpush1.msra.mxu0 %v273
    %2390 = vmatprep.subr.mxu0 0.0
    %2391 = vmatpush1.msra.mxu0 %v278
    %2392 = vmatprep.subr.mxu0 0.0
    %2393 = vmatpush1.msra.mxu0 %v283
    %2394 = vmatprep.subr.mxu0 0.0
    %2395 = vmatpush1.msra.mxu0 %v288
    %2396 = vmatprep.subr.mxu0 0.0
    %2397 = vmatpush1.msra.mxu0 %v293
    %2398 = vmatprep.subr.mxu0 0.0
    %2399 = vmatpush1.msra.mxu0 %v298
    %2400 = vmatprep.subr.mxu0 0.0
    %2401 = vmatpush1.msra.mxu0 %v303
    %2402 = vmatprep.subr.mxu0 0.0
    %2403 = vmatpush1.msra.mxu0 %v308
    %2404 = vmatprep.subr.mxu0 0.0
    %2405 = vmatpush1.msra.mxu0 %v313
    %2406 = vmatprep.subr.mxu0 0.0
    %2407 = vmatpush1.msra.mxu0 %v318
    %2408 = vmatprep.subr.mxu0 0.0
    %2409 = vmatpush1.msra.mxu0 %v323
    %2410 = vmatprep.subr.mxu0 0.0
    %2411 = vmatpush1.msra.mxu0 %v328
    %2412 = vmatprep.subr.mxu0 0.0
    %2413 = vmatpush1.msra.mxu0 %v333
    %2414 = vmatprep.subr.mxu0 0.0
    %2415 = vmatpush1.msra.mxu0 %v338
    %2416 = vmatprep.subr.mxu0 0.0
    %2417 = vmatpush1.msra.mxu0 %v343
    %2418 = vmatprep.subr.mxu0 0.0
    %2419 = vmatpush1.msra.mxu0 0.0
    %2420 = vmatprep.subr.mxu0 0.0
    %2421 = vmatpush1.msra.mxu0 0.0
    %2422 = vmatprep.subr.mxu0 0.0
    %2423 = vmatpush1.msra.mxu0 0.0
    %2424 = vmatprep.subr.mxu0 0.0
    %2425 = vmatpush1.msra.mxu0 0.0
    %2426 = vmatprep.subr.mxu0 0.0
    %2427 = vmatpush1.msra.mxu0 0.0
    %2428 = vmatprep.subr.mxu0 0.0
    %2429 = vmatpush1.msra.mxu0 0.0
    %2430 = vmatprep.subr.mxu0 0.0
    %2431 = vmatpush1.msra.mxu0 0.0
    %2432 = vmatprep.subr.mxu0 0.0
    %2433 = vmatpush1.msra.mxu0 0.0
    %2434 = vmatprep.subr.mxu0 0.0
    %2435 = vmatpush1.msra.mxu0 0.0
    %2436 = vmatprep.subr.mxu0 0.0
    %2437 = vmatpush1.msra.mxu0 0.0
    %2438 = vmatprep.subr.mxu0 0.0
    %2439 = vmatpush1.msra.mxu0 0.0
    %2440 = vmatprep.subr.mxu0 0.0
    %2441 = vmatpush1.msra.mxu0 0.0
    %2442 = vmatprep.mubr.f32.mxu0 %v2376
    %2443 = vmatmul.mubr.f32.gmra.mrb[0].mxu0 %v2373
    %v2444 = vpop.f32.mrb[0].mxu0
    %v2445 = vadd.f32 0.0, %v2444
    %v2446 = vpop.f32.mrb[0].mxu0
    %2447 = vdwg.mxu0
    %v2448 = vadd.f32 %v2445, %v219
    %v2449 = vxor.u32 %v2448, 2147483648
    %v2450 = vmul.f32 %v2449, 1.442695
    %v2451 = vpow.pop %v2450
    %v2452 = vadd.f32 %v2451, 1.0
    %v2453 = vrcp.pop %v2452
    %v2454 = vmul.f32 1.0, %v2453
    %v2455 = vtanh.pop %v2448
    %v2456 = vmul.f32 %v2454, %v2361
    %2458 = vrot.lane.b32.xlu0 %v2455, 32
    %v2459 = vpop.permute.xlu0 %2458
    %v2461 = vmul.f32 %v2454, %v2459
    %2463 = vrot.lane.b32.xlu0 %v2461, 32
    %v2464 = vpop.permute.xlu0 %2463
    %v2466 = vadd.f32 %v2456, %v2464
    %v2467 = vtanh.pop %v2466
    %2469 = vrot.lane.b32.xlu0 %v2467, 32
    %v2470 = vpop.permute.xlu0 %2469
    %v2472 = vmul.f32 %v2454, %v2470
    %2474 = vrot.lane.b32.xlu0 %v2472, 64
    %v2475 = vpop.permute.xlu0 %2474
    %v2477 = vsel %vm344, %v2475, 0.0
    %2478 = vst [vmem:[#allocation5] sm:$0x1] %v2477
    // Predicated region
    $region26: #{encoder_forward.1} parent=1 // pred_check
      _
    $region27: #{encoder_forward.1} parent=1 // pred_check_branch
      %2480 = sbr.rel (0) target = $region29
    $region28: #{encoder_forward.1} parent=1 // pred_region
      %s2482 = ssub.s32 16, 16
      %2483 = vsyncadd [#allocation4], %s2482
      %s2485 = sshll.u32 [#allocation5], 4
      %s2486 = int_to_ptr.vmem [resolvable:$true] %s2485
      %2488 = dma.vmem_to_hbm [thread:$0]  %s2486, 16, %s5, [#allocation4]
    $region29: #{encoder_forward.1} parent=1 // pred_fallthru
      _
    // Predicated region
    $region30: #{encoder_forward.1} parent=1 // pred_check
      _
    $region31: #{encoder_forward.1} parent=1 // pred_check_branch
      %2490 = sbr.rel (0) target = $region33
    $region32: #{encoder_forward.1} parent=1 // pred_region
      %2491 = dma.done [#allocation4], 16
    $region33: #{encoder_forward.1} parent=1 // pred_fallthru
      _
    %2492 = vsyncpa [#allocation3], 1
    %2493 = vsyncpa [#allocation4], 1

</llo_original>
